<compile_context>
chip_gen: v7x
topology: tpu7x:2x2x1
jax: 0.10.0
libtpu: 0.0.40
codegen_flags: <defaults>
</compile_context>

<pallas_src>
import functools

import jax
import jax.numpy as jnp
from jax.experimental import pallas as pl
from jax.experimental.pallas import tpu as pltpu


def _round_up(x, m):
    return ((x + m - 1) // m) * m


def _vmem_capacity_bytes():
    try:
        return int(pltpu.get_tpu_info().vmem_capacity_bytes)
    except Exception:
        return 64 * 1024 * 1024  # conservative (v7x per-TC physical VMEM)


def value_critic_kernel(x_ref, wb_ref, bb_ref, w1_ref, s1_ref, b1_ref,
                        w2_ref, b2_ref, w3_ref, b3_ref, o_ref, acc_ref,
                        *, batch):
    k = pl.program_id(0)

    @pl.when(k == 0)
    def _():
        acc_ref[...] = jnp.zeros_like(acc_ref)

    # Lane-parallel partial GAP sums: add the TS/128 lane groups of this chunk
    # on the VPU (128-aligned static slices are vreg selections, no XLU work).
    # The single cross-lane reduce happens once, in the finalize branch.
    x = x_ref[...].astype(jnp.float32)                  # (B*C, TS)
    n_groups = x.shape[1] // 128
    part = x[:, 0:128]
    for g in range(1, n_groups):
        part = part + x[:, g * 128:(g + 1) * 128]
    acc_ref[...] += part                                # (B*C, 128) f32

    # Output is written only on the last step; its constant block index keeps
    # it VMEM-resident across the reduction axis (standard accumulator P3).
    @pl.when(k == pl.num_programs(0) - 1)
    def _():
        # One XLU reduce; 1/S is already folded into wb (static weight).
        pooled = jnp.sum(acc_ref[...].reshape(batch, -1, 128), axis=-1)  # (B, C) f32
        # Stand-in backbone projection kept fully in f32 (tiny K=C matmul);
        # avoids rounding the pooled feature to bf16.
        feat = jnp.maximum(
            jnp.dot(pooled, wb_ref[...], preferred_element_type=jnp.float32)
            + bb_ref[...], 0.0)                                          # (B, 2048)
        # l1: int8 weight (halves the dominant weight DMA); dequant is a bf16
        # cast feeding the MXU, per-channel scale applied to the tiny (B, 256)
        # result on the VPU, then bias + ReLU.
        h1 = jnp.maximum(
            jnp.dot(feat.astype(jnp.bfloat16), w1_ref[...].astype(jnp.bfloat16),
                    preferred_element_type=jnp.float32) * s1_ref[...]
            + b1_ref[...], 0.0)
        # l2 on the MXU (bf16 operands, f32 accumulate).
        h2 = jnp.maximum(
            jnp.dot(h1.astype(jnp.bfloat16), w2_ref[...],
                    preferred_element_type=jnp.float32) + b2_ref[...], 0.0)
        # l3 (256 -> 1) as VPU multiply + XLU reduce; no N=1 MXU matmul.
        v = jnp.sum(h2 * w3_ref[...], axis=-1, keepdims=True) + b3_ref[0, 0]
        # Lane-dense store; wrapper slices column 0.
        o_ref[...] = jnp.broadcast_to(v, o_ref.shape)


def value_critic_forward(state, params):
    """state: [B, C, D, H, W]; returns [B, 1] float32."""
    B, C, D, H, W = state.shape
    S = D * H * W
    wb, bb, w1, scale1, b1, w2, b2, w3, b3 = params

    rows = B * C
    x = state.reshape(rows, S)              # free reshape of a contiguous array
    itembytes = x.dtype.itemsize

    # --- VMEM-aware S-chunk sizing (v5e/v6e: 128 MiB, v7x: 64 MiB) ---------
    vmem_cap = _vmem_capacity_bytes()
    weight_bytes = sum(int(p.size) * p.dtype.itemsize for p in params)
    act_budget = max(512 * 1024, min(vmem_cap // 4, 8 * 1024 * 1024))
    ts_cap = (act_budget // (2 * rows * itembytes)) // 128 * 128
    ts_cap = int(max(128, min(ts_cap, 8192)))     # also bounds the unrolled adds

    S_lane = _round_up(S, 128)
    if ts_cap >= S_lane:
        TS, S_pad = S_lane, S_lane                # single grid step
    else:
        TS = ts_cap
        S_pad = _round_up(S, TS)
    n_chunks = S_pad // TS
    if S_pad != S:
        # Zero-pad only the spatial axis (zeros do not perturb the sums and
        # 1/S is folded into wb).  No batch padding, no 4x activation bytes.
        x = jnp.pad(x, ((0, 0), (0, S_pad - S)))

    vmem_need = (2 * rows * TS * itembytes        # double-buffered activation
                 + 2 * weight_bytes               # resident weights (+ copy)
                 + rows * 128 * 4                 # GAP accumulator scratch
                 + 2 * B * 128 * 4                # output block
                 + (1 << 20))                     # margin / compiler scratch
    vmem_limit = int(min(max(vmem_need, 32 * 1024 * 1024), vmem_cap))

    def nbytes(a):
        return int(a.size) * a.dtype.itemsize

    cost = pl.CostEstimate(
        flops=rows * S_pad                         # GAP (adds only)
        + 2 * B * (C * 2048 + 2048 * 256 + 256 * 256 + 256),
        transcendentals=0,
        bytes_accessed=nbytes(x) + weight_bytes + B * 128 * 4,
    )

    kern = functools.partial(value_critic_kernel, batch=B)
    out = pl.pallas_call(
        kern,
        out_shape=jax.ShapeDtypeStruct((B, 128), jnp.float32),
        grid_spec=pltpu.PrefetchScalarGridSpec(
            num_scalar_prefetch=0,
            grid=(n_chunks,),
            in_specs=[
                # Activation streams chunk-by-chunk (pipelined DMA), 2-D so
                # every vreg gets full sublane occupancy.
                pl.BlockSpec((rows, TS), lambda k: (0, k)),
                # Weights / biases: constant block index -> fetched once.
                pl.BlockSpec((C, 2048), lambda k: (0, 0)),      # wb (f32, 1/S folded)
                pl.BlockSpec((1, 2048), lambda k: (0, 0)),      # bb
                pl.BlockSpec((2048, 256), lambda k: (0, 0)),    # w1 (int8)
                pl.BlockSpec((1, 256), lambda k: (0, 0)),       # scale1
                pl.BlockSpec((1, 256), lambda k: (0, 0)),       # b1
                pl.BlockSpec((256, 256), lambda k: (0, 0)),     # w2 (bf16)
                pl.BlockSpec((1, 256), lambda k: (0, 0)),       # b2
                pl.BlockSpec((1, 256), lambda k: (0, 0)),       # w3 row
                # b3 is a true scalar -> SMEM, no padded VMEM tile / DMA.
                pl.BlockSpec(memory_space=pltpu.MemorySpace.SMEM),
            ],
            out_specs=pl.BlockSpec((B, 128), lambda k: (0, 0)),
            scratch_shapes=[pltpu.VMEM((rows, 128), jnp.float32)],
        ),
        compiler_params=pltpu.CompilerParams(
            dimension_semantics=("arbitrary",),     # S is a reduction axis
            vmem_limit_bytes=vmem_limit,
        ),
        cost_estimate=cost,
    )(x, wb, bb, w1, scale1, b1, w2, b2, w3, b3)
    return out[:, :1]


def init_params(key, n_doppler, spatial_size):
    """Deterministic synthetic weights.

    * wb (stand-in backbone projection) stays f32 with the GAP 1/S folded in
      at init time (weights are static), so the pooled feature is never
      rounded to bf16 before the projection.
    * w1 (the dominant 2048x256 DMA) is weight-only int8 with per-output-
      channel scales; w2 is bf16.  Biases stay f32.
    * l3's weight keeps its natural (1, 256) PyTorch row (applied as VPU dot).
    """
    def linear(k, fan_in, fan_out):
        kw, kb = jax.random.split(k)
        bound = 1.0 / jnp.sqrt(fan_in)
        w = jax.random.uniform(kw, (fan_in, fan_out), jnp.float32, -bound, bound)
        b = jax.random.uniform(kb, (1, fan_out), jnp.float32, -bound, bound)
        return w, b

    k0, k1, k2, k3 = jax.random.split(key, 4)
    wb, bb = linear(k0, n_doppler, 2048)            # stand-in backbone proj
    wb = wb / float(spatial_size)                   # fold GAP mean into weight

    w1f, b1 = linear(k1, 2048, 256)                 # self.l1 -> int8 + scales
    scale1 = jnp.maximum(jnp.max(jnp.abs(w1f), axis=0, keepdims=True) / 127.0,
                         1e-8)
    w1 = jnp.round(w1f / scale1).astype(jnp.int8)

    w2f, b2 = linear(k2, 256, 256)                  # self.l2 -> bf16
    w2 = w2f.astype(jnp.bfloat16)

    w3c, b3 = linear(k3, 256, 1)                    # self.l3
    w3 = w3c.reshape(1, 256)                        # PyTorch weight row
    b3 = b3.reshape(1, 1)
    return (wb, bb, w1, scale1, b1, w2, b2, w3, b3)


def reference_forward(state, params):
    """Pure-JAX reference with the same precision scheme as the kernel."""
    wb, bb, w1, scale1, b1, w2, b2, w3, b3 = params
    B, C = state.shape[:2]
    # Sum-pool; the 1/S normalisation is folded into wb.
    pooled = jnp.sum(state.reshape(B, C, -1).astype(jnp.float32), axis=-1)
    feat = jnp.maximum(
        jnp.dot(pooled, wb, preferred_element_type=jnp.float32) + bb, 0.0)
    h1 = jnp.maximum(
        jnp.dot(feat.astype(jnp.bfloat16), w1.astype(jnp.bfloat16),
                preferred_element_type=jnp.float32) * scale1 + b1, 0.0)
    h2 = jnp.maximum(
        jnp.dot(h1.astype(jnp.bfloat16), w2,
                preferred_element_type=jnp.float32) + b2, 0.0)
    return jnp.sum(h2 * w3, axis=-1, keepdims=True) + b3


if __name__ == "__main__":
    key = jax.random.PRNGKey(0)
    k_state, k_params = jax.random.split(key)

    # Small shapes consistent with the module: state [B, nDoppler, D, H, W].
    B, C, D, H, W = 2, 4, 8, 16, 16
    state = jax.random.normal(k_state, (B, C, D, H, W), jnp.float32)
    params = init_params(k_params, C, D * H * W)

    out = jax.block_until_ready(value_critic_forward(state, params))
    ref = reference_forward(state, params)

    assert out.shape == (B, 1), out.shape
    # bf16 head operands => looser tolerance than a pure-f32 implementation.
    assert jnp.allclose(out, ref, rtol=2e-2, atol=2e-2), (out, ref)

    print("KERNEL_OK")
</pallas_src>

<mosaic_0001>
module attributes {stable_mosaic.version = 11 : i64} {
  func.func @value_critic_kernel(%arg0: i32, %arg1: memref<8x2048xf32, #tpu.memory_space<vmem>>, %arg2: memref<4x2048xf32, #tpu.memory_space<vmem>>, %arg3: memref<1x2048xf32, #tpu.memory_space<vmem>>, %arg4: memref<2048x256xi8, #tpu.memory_space<vmem>>, %arg5: memref<1x256xf32, #tpu.memory_space<vmem>>, %arg6: memref<1x256xf32, #tpu.memory_space<vmem>>, %arg7: memref<256x256xbf16, #tpu.memory_space<vmem>>, %arg8: memref<1x256xf32, #tpu.memory_space<vmem>>, %arg9: memref<1x256xf32, #tpu.memory_space<vmem>>, %arg10: memref<1x1xf32, #tpu.memory_space<smem>>, %arg11: memref<2x128xf32, #tpu.memory_space<vmem>>, %arg12: memref<8x128xf32, #tpu.memory_space<vmem>>) attributes {dimension_semantics = [#tpu.dimension_semantics<arbitrary>], iteration_bounds = array<i64: 1>, scalar_prefetch = 0 : i64, scratch_operands = 1 : i64, tpu.core_type = #tpu.core_type<tc>, window_params = [{transform_indices = @transform_0, window_bounds = array<i64: 8, 2048>}, {pipeline_mode = #tpu.pipeline_mode<synchronous>, transform_indices = @transform_1, window_bounds = array<i64: 4, 2048>}, {pipeline_mode = #tpu.pipeline_mode<synchronous>, transform_indices = @transform_2, window_bounds = array<i64: 1, 2048>}, {pipeline_mode = #tpu.pipeline_mode<synchronous>, transform_indices = @transform_3, window_bounds = array<i64: 2048, 256>}, {pipeline_mode = #tpu.pipeline_mode<synchronous>, transform_indices = @transform_4, window_bounds = array<i64: 1, 256>}, {pipeline_mode = #tpu.pipeline_mode<synchronous>, transform_indices = @transform_5, window_bounds = array<i64: 1, 256>}, {pipeline_mode = #tpu.pipeline_mode<synchronous>, transform_indices = @transform_6, window_bounds = array<i64: 256, 256>}, {pipeline_mode = #tpu.pipeline_mode<synchronous>, transform_indices = @transform_7, window_bounds = array<i64: 1, 256>}, {pipeline_mode = #tpu.pipeline_mode<synchronous>, transform_indices = @transform_8, window_bounds = array<i64: 1, 256>}, {transform_indices = @transform_9, window_bounds = array<i64: 1, 1>}, {pipeline_mode = #tpu.pipeline_mode<synchronous>, transform_indices = @transform_10, window_bounds = array<i64: 2, 128>}]} {
    %c0_i32 = arith.constant 0 : i32
    %0 = arith.cmpi eq, %arg0, %c0_i32 : i32
    %1 = arith.extui %0 : i1 to i32
    %c0_i32_0 = arith.constant 0 : i32
    %2 = arith.cmpi ne, %1, %c0_i32_0 : i32
    scf.if %2 {
      %cst = arith.constant 0.000000e+00 : f32
      %41 = vector.broadcast %cst : f32 to vector<8x128xf32>
      %c0_8 = arith.constant 0 : index
      %c0_9 = arith.constant 0 : index
      %42 = vector.load %arg12[%c0_8, %c0_9] : memref<8x128xf32, #tpu.memory_space<vmem>>, vector<8x128xf32>
      tpu.vector_store %arg12[%c0_8, %c0_9], %41 {strides = array<i32>} : memref<8x128xf32, #tpu.memory_space<vmem>>, vector<8x128xf32>,
    } else {
    }
    %c0 = arith.constant 0 : index
    %c0_1 = arith.constant 0 : index
    %3 = vector.load %arg1[%c0, %c0_1] : memref<8x2048xf32, #tpu.memory_space<vmem>>, vector<8x2048xf32>
    %4 = vector.extract_strided_slice %3 {offsets = [0, 0], sizes = [8, 128], strides = [1, 1]} : vector<8x2048xf32> to vector<8x128xf32>
    %5 = vector.extract_strided_slice %3 {offsets = [0, 128], sizes = [8, 128], strides = [1, 1]} : vector<8x2048xf32> to vector<8x128xf32>
    %6 = arith.addf %4, %5 : vector<8x128xf32>
    %7 = vector.extract_strided_slice %3 {offsets = [0, 256], sizes = [8, 128], strides = [1, 1]} : vector<8x2048xf32> to vector<8x128xf32>
    %8 = arith.addf %6, %7 : vector<8x128xf32>
    %9 = vector.extract_strided_slice %3 {offsets = [0, 384], sizes = [8, 128], strides = [1, 1]} : vector<8x2048xf32> to vector<8x128xf32>
    %10 = arith.addf %8, %9 : vector<8x128xf32>
    %11 = vector.extract_strided_slice %3 {offsets = [0, 512], sizes = [8, 128], strides = [1, 1]} : vector<8x2048xf32> to vector<8x128xf32>
    %12 = arith.addf %10, %11 : vector<8x128xf32>
    %13 = vector.extract_strided_slice %3 {offsets = [0, 640], sizes = [8, 128], strides = [1, 1]} : vector<8x2048xf32> to vector<8x128xf32>
    %14 = arith.addf %12, %13 : vector<8x128xf32>
    %15 = vector.extract_strided_slice %3 {offsets = [0, 768], sizes = [8, 128], strides = [1, 1]} : vector<8x2048xf32> to vector<8x128xf32>
    %16 = arith.addf %14, %15 : vector<8x128xf32>
    %17 = vector.extract_strided_slice %3 {offsets = [0, 896], sizes = [8, 128], strides = [1, 1]} : vector<8x2048xf32> to vector<8x128xf32>
    %18 = arith.addf %16, %17 : vector<8x128xf32>
    %19 = vector.extract_strided_slice %3 {offsets = [0, 1024], sizes = [8, 128], strides = [1, 1]} : vector<8x2048xf32> to vector<8x128xf32>
    %20 = arith.addf %18, %19 : vector<8x128xf32>
    %21 = vector.extract_strided_slice %3 {offsets = [0, 1152], sizes = [8, 128], strides = [1, 1]} : vector<8x2048xf32> to vector<8x128xf32>
    %22 = arith.addf %20, %21 : vector<8x128xf32>
    %23 = vector.extract_strided_slice %3 {offsets = [0, 1280], sizes = [8, 128], strides = [1, 1]} : vector<8x2048xf32> to vector<8x128xf32>
    %24 = arith.addf %22, %23 : vector<8x128xf32>
    %25 = vector.extract_strided_slice %3 {offsets = [0, 1408], sizes = [8, 128], strides = [1, 1]} : vector<8x2048xf32> to vector<8x128xf32>
    %26 = arith.addf %24, %25 : vector<8x128xf32>
    %27 = vector.extract_strided_slice %3 {offsets = [0, 1536], sizes = [8, 128], strides = [1, 1]} : vector<8x2048xf32> to vector<8x128xf32>
    %28 = arith.addf %26, %27 : vector<8x128xf32>
    %29 = vector.extract_strided_slice %3 {offsets = [0, 1664], sizes = [8, 128], strides = [1, 1]} : vector<8x2048xf32> to vector<8x128xf32>
    %30 = arith.addf %28, %29 : vector<8x128xf32>
    %31 = vector.extract_strided_slice %3 {offsets = [0, 1792], sizes = [8, 128], strides = [1, 1]} : vector<8x2048xf32> to vector<8x128xf32>
    %32 = arith.addf %30, %31 : vector<8x128xf32>
    %33 = vector.extract_strided_slice %3 {offsets = [0, 1920], sizes = [8, 128], strides = [1, 1]} : vector<8x2048xf32> to vector<8x128xf32>
    %34 = arith.addf %32, %33 : vector<8x128xf32>
    %c0_2 = arith.constant 0 : index
    %c0_3 = arith.constant 0 : index
    %35 = vector.load %arg12[%c0_2, %c0_3] : memref<8x128xf32, #tpu.memory_space<vmem>>, vector<8x128xf32>
    %36 = arith.addf %35, %34 : vector<8x128xf32>
    %c0_4 = arith.constant 0 : index
    %c0_5 = arith.constant 0 : index
    %37 = vector.load %arg12[%c0_4, %c0_5] : memref<8x128xf32, #tpu.memory_space<vmem>>, vector<8x128xf32>
    tpu.vector_store %arg12[%c0_4, %c0_5], %36 {strides = array<i32>} : memref<8x128xf32, #tpu.memory_space<vmem>>, vector<8x128xf32>,
    %c0_i32_6 = arith.constant 0 : i32
    %38 = arith.cmpi eq, %arg0, %c0_i32_6 : i32
    %39 = arith.extui %38 : i1 to i32
    %c0_i32_7 = arith.constant 0 : i32
    %40 = arith.cmpi ne, %39, %c0_i32_7 : i32
    scf.if %40 {
      %c0_8 = arith.constant 0 : index
      %c0_9 = arith.constant 0 : index
      %41 = vector.load %arg12[%c0_8, %c0_9] : memref<8x128xf32, #tpu.memory_space<vmem>>, vector<8x128xf32>
      %42 = vector.shape_cast %41 : vector<8x128xf32> to vector<2x4x128xf32>
      %cst = arith.constant dense<0.000000e+00> : vector<2x4xf32>
      %43 = vector.multi_reduction <add>, %42, %cst [2] : vector<2x4x128xf32> to vector<2x4xf32>
      %c0_10 = arith.constant 0 : index
      %c0_11 = arith.constant 0 : index
      %44 = vector.load %arg2[%c0_10, %c0_11] : memref<4x2048xf32, #tpu.memory_space<vmem>>, vector<4x2048xf32>
      %cst_12 = arith.constant dense<0.000000e+00> : vector<2x2048xf32>
      %45 = tpu.matmul %43, %44, %cst_12 {dimension_numbers = #tpu.dot_dimension_numbers<[1], [0], [0], [1], [0, 0, 1, 1], [], []>} : vector<2x4xf32>, vector<4x2048xf32>, vector<2x2048xf32> -> vector<2x2048xf32>
      %c0_13 = arith.constant 0 : index
      %c0_14 = arith.constant 0 : index
      %46 = vector.load %arg3[%c0_13, %c0_14] : memref<1x2048xf32, #tpu.memory_space<vmem>>, vector<1x2048xf32>
      %47 = vector.broadcast %46 : vector<1x2048xf32> to vector<2x2048xf32>
      %48 = arith.addf %45, %47 : vector<2x2048xf32>
      %cst_15 = arith.constant 0.000000e+00 : f32
      %49 = vector.broadcast %cst_15 : f32 to vector<2x2048xf32>
      %50 = arith.maximumf %48, %49 : vector<2x2048xf32>
      %51 = arith.truncf %50 : vector<2x2048xf32> to vector<2x2048xbf16>
      %c0_16 = arith.constant 0 : index
      %c0_17 = arith.constant 0 : index
      %52 = vector.load %arg4[%c0_16, %c0_17] : memref<2048x256xi8, #tpu.memory_space<vmem>>, vector<2048x256xi8>
      %53 = arith.sitofp %52 : vector<2048x256xi8> to vector<2048x256xbf16>
      %cst_18 = arith.constant dense<0.000000e+00> : vector<2x256xf32>
      %54 = tpu.matmul %51, %53, %cst_18 {dimension_numbers = #tpu.dot_dimension_numbers<[1], [0], [0], [1], [0, 0, 1, 1], [], []>} : vector<2x2048xbf16>, vector<2048x256xbf16>, vector<2x256xf32> -> vector<2x256xf32>
      %c0_19 = arith.constant 0 : index
      %c0_20 = arith.constant 0 : index
      %55 = vector.load %arg5[%c0_19, %c0_20] : memref<1x256xf32, #tpu.memory_space<vmem>>, vector<1x256xf32>
      %56 = vector.broadcast %55 : vector<1x256xf32> to vector<2x256xf32>
      %57 = arith.mulf %54, %56 : vector<2x256xf32>
      %c0_21 = arith.constant 0 : index
      %c0_22 = arith.constant 0 : index
      %58 = vector.load %arg6[%c0_21, %c0_22] : memref<1x256xf32, #tpu.memory_space<vmem>>, vector<1x256xf32>
      %59 = vector.broadcast %58 : vector<1x256xf32> to vector<2x256xf32>
      %60 = arith.addf %57, %59 : vector<2x256xf32>
      %cst_23 = arith.constant 0.000000e+00 : f32
      %61 = vector.broadcast %cst_23 : f32 to vector<2x256xf32>
      %62 = arith.maximumf %60, %61 : vector<2x256xf32>
      %63 = arith.truncf %62 : vector<2x256xf32> to vector<2x256xbf16>
      %c0_24 = arith.constant 0 : index
      %c0_25 = arith.constant 0 : index
      %64 = vector.load %arg7[%c0_24, %c0_25] : memref<256x256xbf16, #tpu.memory_space<vmem>>, vector<256x256xbf16>
      %cst_26 = arith.constant dense<0.000000e+00> : vector<2x256xf32>
      %65 = tpu.matmul %63, %64, %cst_26 {dimension_numbers = #tpu.dot_dimension_numbers<[1], [0], [0], [1], [0, 0, 1, 1], [], []>} : vector<2x256xbf16>, vector<256x256xbf16>, vector<2x256xf32> -> vector<2x256xf32>
      %c0_27 = arith.constant 0 : index
      %c0_28 = arith.constant 0 : index
      %66 = vector.load %arg8[%c0_27, %c0_28] : memref<1x256xf32, #tpu.memory_space<vmem>>, vector<1x256xf32>
      %67 = vector.broadcast %66 : vector<1x256xf32> to vector<2x256xf32>
      %68 = arith.addf %65, %67 : vector<2x256xf32>
      %cst_29 = arith.constant 0.000000e+00 : f32
      %69 = vector.broadcast %cst_29 : f32 to vector<2x256xf32>
      %70 = arith.maximumf %68, %69 : vector<2x256xf32>
      %c0_30 = arith.constant 0 : index
      %c0_31 = arith.constant 0 : index
      %71 = vector.load %arg9[%c0_30, %c0_31] : memref<1x256xf32, #tpu.memory_space<vmem>>, vector<1x256xf32>
      %72 = vector.broadcast %71 : vector<1x256xf32> to vector<2x256xf32>
      %73 = arith.mulf %70, %72 : vector<2x256xf32>
      %cst_32 = arith.constant dense<0.000000e+00> : vector<2xf32>
      %74 = vector.multi_reduction <add>, %73, %cst_32 [1] : vector<2x256xf32> to vector<2xf32>
      %75 = vector.shape_cast %74 : vector<2xf32> to vector<2x1xf32>
      %c0_33 = arith.constant 0 : index
      %c0_34 = arith.constant 0 : index
      %76 = memref.load %arg10[%c0_33, %c0_34] : memref<1x1xf32, #tpu.memory_space<smem>>
      %77 = vector.broadcast %76 : f32 to vector<2x1xf32>
      %78 = arith.addf %75, %77 : vector<2x1xf32>
      %79 = vector.shape_cast %78 : vector<2x1xf32> to vector<2x1xf32>
      %80 = vector.broadcast %79 : vector<2x1xf32> to vector<2x128xf32>
      %c0_35 = arith.constant 0 : index
      %c0_36 = arith.constant 0 : index
      %81 = vector.load %arg11[%c0_35, %c0_36] : memref<2x128xf32, #tpu.memory_space<vmem>>, vector<2x128xf32>
      tpu.vector_store %arg11[%c0_35, %c0_36], %80 {strides = array<i32>} : memref<2x128xf32, #tpu.memory_space<vmem>>, vector<2x128xf32>,
    } else {
    }
    return
  }
  func.func @transform_0(%arg0: i32) -> (i32, i32) {
    %c0_i32 = arith.constant 0 : i32
    %c0_i32_0 = arith.constant 0 : i32
    return %c0_i32, %arg0 : i32, i32
  }
  func.func @transform_1(%arg0: i32) -> (i32, i32) {
    %c0_i32 = arith.constant 0 : i32
    %c0_i32_0 = arith.constant 0 : i32
    %c0_i32_1 = arith.constant 0 : i32
    return %c0_i32, %c0_i32_0 : i32, i32
  }
  func.func @transform_2(%arg0: i32) -> (i32, i32) {
    %c0_i32 = arith.constant 0 : i32
    %c0_i32_0 = arith.constant 0 : i32
    %c0_i32_1 = arith.constant 0 : i32
    return %c0_i32, %c0_i32_0 : i32, i32
  }
  func.func @transform_3(%arg0: i32) -> (i32, i32) {
    %c0_i32 = arith.constant 0 : i32
    %c0_i32_0 = arith.constant 0 : i32
    %c0_i32_1 = arith.constant 0 : i32
    return %c0_i32, %c0_i32_0 : i32, i32
  }
  func.func @transform_4(%arg0: i32) -> (i32, i32) {
    %c0_i32 = arith.constant 0 : i32
    %c0_i32_0 = arith.constant 0 : i32
    %c0_i32_1 = arith.constant 0 : i32
    return %c0_i32, %c0_i32_0 : i32, i32
  }
  func.func @transform_5(%arg0: i32) -> (i32, i32) {
    %c0_i32 = arith.constant 0 : i32
    %c0_i32_0 = arith.constant 0 : i32
    %c0_i32_1 = arith.constant 0 : i32
    return %c0_i32, %c0_i32_0 : i32, i32
  }
  func.func @transform_6(%arg0: i32) -> (i32, i32) {
    %c0_i32 = arith.constant 0 : i32
    %c0_i32_0 = arith.constant 0 : i32
    %c0_i32_1 = arith.constant 0 : i32
    return %c0_i32, %c0_i32_0 : i32, i32
  }
  func.func @transform_7(%arg0: i32) -> (i32, i32) {
    %c0_i32 = arith.constant 0 : i32
    %c0_i32_0 = arith.constant 0 : i32
    %c0_i32_1 = arith.constant 0 : i32
    return %c0_i32, %c0_i32_0 : i32, i32
  }
  func.func @transform_8(%arg0: i32) -> (i32, i32) {
    %c0_i32 = arith.constant 0 : i32
    %c0_i32_0 = arith.constant 0 : i32
    %c0_i32_1 = arith.constant 0 : i32
    return %c0_i32, %c0_i32_0 : i32, i32
  }
  func.func @transform_9(%arg0: i32) -> (i32, i32) {
    %c0_i32 = arith.constant 0 : i32
    %c0_i32_0 = arith.constant 0 : i32
    %c0_i32_1 = arith.constant 0 : i32
    return %c0_i32, %c0_i32_0 : i32, i32
  }
  func.func @transform_10(%arg0: i32) -> (i32, i32) {
    %c0_i32 = arith.constant 0 : i32
    %c0_i32_0 = arith.constant 0 : i32
    %c0_i32_1 = arith.constant 0 : i32
    return %c0_i32, %c0_i32_0 : i32, i32
  }
}

</mosaic_0001>

<llo_original>
// kernel: tpu_custom_call.1
$region0: #{tpu_custom_call.1}
  #allocation0 [shape = 'u32[]', space=smem, size = 0x4, offset = 0x4, fixed_abs, tag = 'smem constant byte address 0x4 - core index']
  #allocation1 [shape = 'u32[144,128]{1,0:T(1,128)}', space=vmem, size = 0x12000, scoped, tag = 'internal scratch']
  #allocation2 [shape = 'f32[8,128]{1,0:T(8,128)}', space=vmem, size = 0x1000, scoped, tag = 'scratch operand']
  #allocation3 [shape = 'f32[1,1]{1,0:T(1,128)S(6)}', space=smem, size = 0x200, scoped, tag = 'scoped memory for tpu_custom_call.1']
  %s0 = inlined_call_operand.hbm [shape: f32[8,2048], index: 0, kind: input, shape index: {}]
  %s1 = inlined_call_operand.hbm [shape: f32[4,2048], index: 1, kind: input, shape index: {}]
  %s2 = inlined_call_operand.hbm [shape: f32[1,2048], index: 2, kind: input, shape index: {}]
  %s3 = inlined_call_operand.hbm [shape: s8[2048,256], index: 3, kind: input, shape index: {}]
  %s4 = inlined_call_operand.vmem [shape: f32[1,256], index: 4, kind: input, shape index: {}]
  %s5 = inlined_call_operand.vmem [shape: f32[1,256], index: 5, kind: input, shape index: {}]
  %s6 = inlined_call_operand.hbm [shape: bf16[256,256], index: 6, kind: input, shape index: {}]
  %s7 = inlined_call_operand.vmem [shape: f32[1,256], index: 7, kind: input, shape index: {}]
  %s8 = inlined_call_operand.vmem [shape: f32[1,256], index: 8, kind: input, shape index: {}]
  %s9 = inlined_call_operand.<no memory space> [shape: f32[1,1], index: 9, kind: input, shape index: {}]
  %s10 = inlined_call_operand.hbm [shape: f32[2,128], index: 10, kind: output, shape index: {}]
  %s11 = sld [smem:[#allocation0]]
  $region78: #{tpu_custom_call.1} parent=0
    _
  %s13 = ssub.s32 1, %s11
  %s14 = scalar_select 0, %s13, %s11
  %15 = sst [smem:[#allocation3]] %s9
  $region1: #{tpu_custom_call.1} parent=0
    #allocation4 [shape = 'u8[65536]{0}', space=vmem, size = 0x10000, scoped, tag = 'input window, operand 0, single buffered']
    #allocation5 [shape = 's32[1]{0}', space=sflag, size = 0x4, scoped, tag = 'scoped memory for tpu_custom_call.1']
    #allocation6 [shape = 's32[1]{0}', space=sflag, size = 0x4, scoped, tag = 'scoped memory for tpu_custom_call.1']
    #allocation7 [shape = 'u8[32768]{0}', space=vmem, size = 0x8000, scoped, tag = 'input window, operand 1, single buffered']
    #allocation8 [shape = 's32[1]{0}', space=sflag, size = 0x4, scoped, tag = 'scoped memory for tpu_custom_call.1']
    #allocation9 [shape = 'u8[8192]{0}', space=vmem, size = 0x2000, scoped, tag = 'input window, operand 2, single buffered']
    #allocation10 [shape = 'u8[524288]{0}', space=vmem, size = 0x80000, scoped, tag = 'input window, operand 3, single buffered']
    #allocation11 [shape = 's32[1]{0}', space=sflag, size = 0x4, scoped, tag = 'scoped memory for tpu_custom_call.1']
    #allocation12 [shape = 'u8[131072]{0}', space=vmem, size = 0x20000, scoped, tag = 'input window, operand 6, single buffered']
    #allocation13 [shape = 'u8[1024]{0}', space=vmem, size = 0x400, scoped, tag = 'output window, operand 0, single buffered']
    %16 = vsyncpa [#allocation5], 0
    %17 = vsyncpa [#allocation8], 0
    %18 = vsyncpa [#allocation11], 0
    %19 = vsyncpa [#allocation6], 0
    // Predicated region
    $region2: #{tpu_custom_call.1} parent=1 // pred_check
      _
    $region3: #{tpu_custom_call.1} parent=1 // pred_check_branch
      %21 = sbr.rel (0) target = $region5
    $region4: #{tpu_custom_call.1} parent=1 // pred_region
      %s23 = ssub.s32 2048, 2048
      %24 = vsyncadd [#allocation5], %s23
      %s26 = sshll.u32 [#allocation4], 4
      %s27 = int_to_ptr.vmem [resolvable:$true] %s26
      %29 = dma.hbm_to_vmem [thread:$0]  %s0, 2048, %s27, [#allocation5]
    $region5: #{tpu_custom_call.1} parent=1 // pred_fallthru
      _
    // Predicated region
    $region6: #{tpu_custom_call.1} parent=1 // pred_check
      _
    $region7: #{tpu_custom_call.1} parent=1 // pred_check_branch
      %31 = sbr.rel (0) target = $region9
    $region8: #{tpu_custom_call.1} parent=1 // pred_region
      %s33 = ssub.s32 1024, 1024
      %34 = vsyncadd [#allocation8], %s33
      %s36 = sshll.u32 [#allocation7], 4
      %s37 = int_to_ptr.vmem [resolvable:$true] %s36
      %39 = dma.hbm_to_vmem [thread:$0]  %s1, 1024, %s37, [#allocation8]
    $region9: #{tpu_custom_call.1} parent=1 // pred_fallthru
      _
    // Predicated region
    $region10: #{tpu_custom_call.1} parent=1 // pred_check
      _
    $region11: #{tpu_custom_call.1} parent=1 // pred_check_branch
      %41 = sbr.rel (0) target = $region13
    $region12: #{tpu_custom_call.1} parent=1 // pred_region
      %s43 = ssub.s32 256, 256
      %44 = vsyncadd [#allocation8], %s43
      %s46 = sshll.u32 [#allocation9], 4
      %s47 = int_to_ptr.vmem [resolvable:$true] %s46
      %49 = dma.hbm_to_vmem [thread:$0]  %s2, 256, %s47, [#allocation8]
    $region13: #{tpu_custom_call.1} parent=1 // pred_fallthru
      _
    // Predicated region
    $region14: #{tpu_custom_call.1} parent=1 // pred_check
      _
    $region15: #{tpu_custom_call.1} parent=1 // pred_check_branch
      %51 = sbr.rel (0) target = $region17
    $region16: #{tpu_custom_call.1} parent=1 // pred_region
      %s53 = ssub.s32 16384, 16384
      %54 = vsyncadd [#allocation11], %s53
      %s55 = sshll.u32 [#allocation10], 4
      %s56 = int_to_ptr.vmem [resolvable:$true] %s55
      %61 = dma.hbm_to_vmem [thread:$0]  %s3, 16384, %s56, [#allocation11], 256, 256, 16
    $region17: #{tpu_custom_call.1} parent=1 // pred_fallthru
      _
    // Predicated region
    $region18: #{tpu_custom_call.1} parent=1 // pred_check
      _
    $region19: #{tpu_custom_call.1} parent=1 // pred_check_branch
      %63 = sbr.rel (0) target = $region21
    $region20: #{tpu_custom_call.1} parent=1 // pred_region
      _
    $region21: #{tpu_custom_call.1} parent=1 // pred_fallthru
      _
    // Predicated region
    $region22: #{tpu_custom_call.1} parent=1 // pred_check
      _
    $region23: #{tpu_custom_call.1} parent=1 // pred_check_branch
      %65 = sbr.rel (0) target = $region25
    $region24: #{tpu_custom_call.1} parent=1 // pred_region
      _
    $region25: #{tpu_custom_call.1} parent=1 // pred_fallthru
      _
    // Predicated region
    $region26: #{tpu_custom_call.1} parent=1 // pred_check
      _
    $region27: #{tpu_custom_call.1} parent=1 // pred_check_branch
      %67 = sbr.rel (0) target = $region29
    $region28: #{tpu_custom_call.1} parent=1 // pred_region
      %s69 = ssub.s32 4096, 4096
      %70 = vsyncadd [#allocation11], %s69
      %s71 = sshll.u32 [#allocation12], 4
      %s72 = int_to_ptr.vmem [resolvable:$true] %s71
      %77 = dma.hbm_to_vmem [thread:$0]  %s6, 4096, %s72, [#allocation11], 128, 128, 8
    $region29: #{tpu_custom_call.1} parent=1 // pred_fallthru
      _
    // Predicated region
    $region30: #{tpu_custom_call.1} parent=1 // pred_check
      _
    $region31: #{tpu_custom_call.1} parent=1 // pred_check_branch
      %79 = sbr.rel (0) target = $region33
    $region32: #{tpu_custom_call.1} parent=1 // pred_region
      _
    $region33: #{tpu_custom_call.1} parent=1 // pred_fallthru
      _
    // Predicated region
    $region34: #{tpu_custom_call.1} parent=1 // pred_check
      _
    $region35: #{tpu_custom_call.1} parent=1 // pred_check_branch
      %81 = sbr.rel (0) target = $region37
    $region36: #{tpu_custom_call.1} parent=1 // pred_region
      _
    $region37: #{tpu_custom_call.1} parent=1 // pred_fallthru
      _
    // Predicated region
    $region38: #{tpu_custom_call.1} parent=1 // pred_check
      _
    $region39: #{tpu_custom_call.1} parent=1 // pred_check_branch
      %83 = sbr.rel (0) target = $region41
    $region40: #{tpu_custom_call.1} parent=1 // pred_region
      _
    $region41: #{tpu_custom_call.1} parent=1 // pred_fallthru
      _
    // Predicated region
    $region42: #{tpu_custom_call.1} parent=1 // pred_check
      _
    $region43: #{tpu_custom_call.1} parent=1 // pred_check_branch
      %85 = sbr.rel (0) target = $region45
    $region44: #{tpu_custom_call.1} parent=1 // pred_region
      %86 = dma.done [#allocation5], 2048
    $region45: #{tpu_custom_call.1} parent=1 // pred_fallthru
      _
    // Predicated region
    $region46: #{tpu_custom_call.1} parent=1 // pred_check
      _
    $region47: #{tpu_custom_call.1} parent=1 // pred_check_branch
      %88 = sbr.rel (0) target = $region49
    $region48: #{tpu_custom_call.1} parent=1 // pred_region
      %89 = dma.done [#allocation8], 1024
    $region49: #{tpu_custom_call.1} parent=1 // pred_fallthru
      _
    // Predicated region
    $region50: #{tpu_custom_call.1} parent=1 // pred_check
      _
    $region51: #{tpu_custom_call.1} parent=1 // pred_check_branch
      %91 = sbr.rel (0) target = $region53
    $region52: #{tpu_custom_call.1} parent=1 // pred_region
      %92 = dma.done [#allocation8], 256
    $region53: #{tpu_custom_call.1} parent=1 // pred_fallthru
      _
    // Predicated region
    $region54: #{tpu_custom_call.1} parent=1 // pred_check
      _
    $region55: #{tpu_custom_call.1} parent=1 // pred_check_branch
      %94 = sbr.rel (0) target = $region57
    $region56: #{tpu_custom_call.1} parent=1 // pred_region
      %95 = dma.done [#allocation11], 16384
    $region57: #{tpu_custom_call.1} parent=1 // pred_fallthru
      _
    // Predicated region
    $region58: #{tpu_custom_call.1} parent=1 // pred_check
      _
    $region59: #{tpu_custom_call.1} parent=1 // pred_check_branch
      %97 = sbr.rel (0) target = $region61
    $region60: #{tpu_custom_call.1} parent=1 // pred_region
      %98 = dma.done [#allocation11], 4096
    $region61: #{tpu_custom_call.1} parent=1 // pred_fallthru
      _
    %p99 = scmp.eq.s32.totalorder 0, 0
    // Predicated region
    $region62: #{tpu_custom_call.1} parent=1 // pred_check
      %p100 = pneg %p99
    $region63: #{tpu_custom_call.1} parent=1 // pred_check_branch
      %102 = sbr.rel (%p100) target = $region65
    $region64: #{tpu_custom_call.1} parent=1 // pred_region
      %103 = vst [vmem:[#allocation2] sm:$0xff] 0.0
    $region65: #{tpu_custom_call.1} parent=1 // pred_fallthru
      _
    %v104 = vld [vmem:[#allocation4] sm:$0xff]
    %v105 = vld [vmem:[#allocation4 + $0x8] sm:$0xff]
    %v106 = vld [vmem:[#allocation4 + $0x10] sm:$0xff]
    %v107 = vld [vmem:[#allocation4 + $0x18] sm:$0xff]
    %v108 = vld [vmem:[#allocation4 + $0x20] sm:$0xff]
    %v109 = vld [vmem:[#allocation4 + $0x28] sm:$0xff]
    %v110 = vld [vmem:[#allocation4 + $0x30] sm:$0xff]
    %v111 = vld [vmem:[#allocation4 + $0x38] sm:$0xff]
    %v112 = vld [vmem:[#allocation4 + $0x40] sm:$0xff]
    %v113 = vld [vmem:[#allocation4 + $0x48] sm:$0xff]
    %v114 = vld [vmem:[#allocation4 + $0x50] sm:$0xff]
    %v115 = vld [vmem:[#allocation4 + $0x58] sm:$0xff]
    %v116 = vld [vmem:[#allocation4 + $0x60] sm:$0xff]
    %v117 = vld [vmem:[#allocation4 + $0x68] sm:$0xff]
    %v118 = vld [vmem:[#allocation4 + $0x70] sm:$0xff]
    %v119 = vld [vmem:[#allocation4 + $0x78] sm:$0xff]
    %v120 = vadd.f32 %v104, %v105
    %v121 = vadd.f32 %v120, %v106
    %v122 = vadd.f32 %v121, %v107
    %v123 = vadd.f32 %v122, %v108
    %v124 = vadd.f32 %v123, %v109
    %v125 = vadd.f32 %v124, %v110
    %v126 = vadd.f32 %v125, %v111
    %v127 = vadd.f32 %v126, %v112
    %v128 = vadd.f32 %v127, %v113
    %v129 = vadd.f32 %v128, %v114
    %v130 = vadd.f32 %v129, %v115
    %v131 = vadd.f32 %v130, %v116
    %v132 = vadd.f32 %v131, %v117
    %v133 = vadd.f32 %v132, %v118
    %v134 = vadd.f32 %v133, %v119
    %v135 = vld [vmem:[#allocation2] sm:$0xff]
    %v136 = vadd.f32 %v135, %v134
    %137 = vst [vmem:[#allocation2] sm:$0xff] %v136
    // Predicated region
    $region66: #{tpu_custom_call.1} parent=1 // pred_check
      %p138 = pneg %p99
    $region67: #{tpu_custom_call.1} parent=1 // pred_check_branch
      %140 = sbr.rel (%p138) target = $region69
    $region68: #{tpu_custom_call.1} parent=1 // pred_region
      %v141 = vld [vmem:[#allocation2] sm:$0xff]
      %v143 = vcombine.high %v141, %v141
      %vm145 = vcmask 1043456
      %v146 = vsel %vm145, %v141, 0.0
      %147 = vadd.xlane.f32.xlu0 %v146
      %v148 = vpop.xlane.xlu0 %147
      %v149 = vsel %vm145, %v143, 0.0
      %150 = vadd.xlane.f32.xlu0 %v149
      %v151 = vpop.xlane.xlu0 %150
      %v152 = vld [vmem:[#allocation7] sm:$0xff]
      %v153 = vld [vmem:[#allocation7 + $0x8] sm:$0xff]
      %v154 = vld [vmem:[#allocation7 + $0x10] sm:$0xff]
      %v155 = vld [vmem:[#allocation7 + $0x18] sm:$0xff]
      %v156 = vld [vmem:[#allocation7 + $0x20] sm:$0xff]
      %v157 = vld [vmem:[#allocation7 + $0x28] sm:$0xff]
      %v158 = vld [vmem:[#allocation7 + $0x30] sm:$0xff]
      %v159 = vld [vmem:[#allocation7 + $0x38] sm:$0xff]
      %v160 = vld [vmem:[#allocation9] sm:$0xff]
      %v161 = vld [vmem:[#allocation9 + $0x8] sm:$0xff]
      %v164 = vlaneseq
      %v165 = vshrl.u32 %v164, 7
      %v166 = vsub.s32 0, %v165
      %v167 = vrot.slane %v160, %v166
      %v168 = vlaneseq
      %v169 = vshrl.u32 %v168, 7
      %v170 = vsub.s32 1, %v169
      %v171 = vrot.slane %v160, %v170
      %v172 = vlaneseq
      %v173 = vshrl.u32 %v172, 7
      %v174 = vsub.s32 2, %v173
      %v175 = vrot.slane %v160, %v174
      %v176 = vlaneseq
      %v177 = vshrl.u32 %v176, 7
      %v178 = vsub.s32 3, %v177
      %v179 = vrot.slane %v160, %v178
      %v180 = vlaneseq
      %v181 = vshrl.u32 %v180, 7
      %v182 = vsub.s32 4, %v181
      %v183 = vrot.slane %v160, %v182
      %v184 = vlaneseq
      %v185 = vshrl.u32 %v184, 7
      %v186 = vsub.s32 5, %v185
      %v187 = vrot.slane %v160, %v186
      %v188 = vlaneseq
      %v189 = vshrl.u32 %v188, 7
      %v190 = vsub.s32 6, %v189
      %v191 = vrot.slane %v160, %v190
      %v192 = vlaneseq
      %v193 = vshrl.u32 %v192, 7
      %v194 = vsub.s32 7, %v193
      %v195 = vrot.slane %v160, %v194
      %v196 = vlaneseq
      %v197 = vshrl.u32 %v196, 7
      %v198 = vsub.s32 0, %v197
      %v199 = vrot.slane %v161, %v198
      %v200 = vlaneseq
      %v201 = vshrl.u32 %v200, 7
      %v202 = vsub.s32 1, %v201
      %v203 = vrot.slane %v161, %v202
      %v204 = vlaneseq
      %v205 = vshrl.u32 %v204, 7
      %v206 = vsub.s32 2, %v205
      %v207 = vrot.slane %v161, %v206
      %v208 = vlaneseq
      %v209 = vshrl.u32 %v208, 7
      %v210 = vsub.s32 3, %v209
      %v211 = vrot.slane %v161, %v210
      %v212 = vlaneseq
      %v213 = vshrl.u32 %v212, 7
      %v214 = vsub.s32 4, %v213
      %v215 = vrot.slane %v161, %v214
      %v216 = vlaneseq
      %v217 = vshrl.u32 %v216, 7
      %v218 = vsub.s32 5, %v217
      %v219 = vrot.slane %v161, %v218
      %v220 = vlaneseq
      %v221 = vshrl.u32 %v220, 7
      %v222 = vsub.s32 6, %v221
      %v223 = vrot.slane %v161, %v222
      %v224 = vlaneseq
      %v225 = vshrl.u32 %v224, 7
      %v226 = vsub.s32 7, %v225
      %v227 = vrot.slane %v161, %v226
      %v246 = vlaneseq
      %v247 = vand.u32 %v246, 127
      %v248 = vlaneseq
      %v249 = vshrl.u32 %v248, 7
      %v250 = vsub.s32 %v247, %v249
      %v251 = vrot.slane %v148, %v250
      %v252 = vlaneseq
      %v253 = vshrl.u32 %v252, 7
      %v254 = vsub.s32 %v247, %v253
      %v255 = vrot.slane %v151, %v254
      %vm256 = vcmask 1041409
      %v257 = vsel %vm256, %v255, %v251
      %v266 = vcombine.high %v152, %v152
      %v267 = vcombine.high %v153, %v153
      %v268 = vcombine.high %v154, %v154
      %v269 = vcombine.high %v155, %v155
      %v270 = vcombine.high %v156, %v156
      %v271 = vcombine.high %v157, %v157
      %v272 = vcombine.high %v158, %v158
      %v273 = vcombine.high %v159, %v159
      %vm274 = vcmask 31744
      %v275 = vsel %vm274, %v257, 0
      %v277 = vsel %vm145, %v152, 0
      %v279 = vsel %vm145, %v266, 0
      %v281 = vsel %vm145, %v153, 0
      %v283 = vsel %vm145, %v267, 0
      %v285 = vsel %vm145, %v154, 0
      %v287 = vsel %vm145, %v268, 0
      %v289 = vsel %vm145, %v155, 0
      %v291 = vsel %vm145, %v269, 0
      %v293 = vsel %vm145, %v156, 0
      %v295 = vsel %vm145, %v270, 0
      %v297 = vsel %vm145, %v157, 0
      %v299 = vsel %vm145, %v271, 0
      %v301 = vsel %vm145, %v158, 0
      %v303 = vsel %vm145, %v272, 0
      %v305 = vsel %vm145, %v159, 0
      %v307 = vsel %vm145, %v273, 0
      %309 = vmatprep.subr.mxu0 %v279
      %310 = vmatpush1.msra.mxu0 %v277
      %311 = vmatprep.subr.mxu0 0.0
      %312 = vmatpush1.msra.mxu0 0.0
      %313 = vmatprep.subr.mxu0 0.0
      %314 = vmatpush1.msra.mxu0 0.0
      %315 = vmatprep.subr.mxu0 0.0
      %316 = vmatpush1.msra.mxu0 0.0
      %317 = vmatprep.subr.mxu0 0.0
      %318 = vmatpush1.msra.mxu0 0.0
      %319 = vmatprep.subr.mxu0 0.0
      %320 = vmatpush1.msra.mxu0 0.0
      %321 = vmatprep.subr.mxu0 0.0
      %322 = vmatpush1.msra.mxu0 0.0
      %323 = vmatprep.subr.mxu0 0.0
      %324 = vmatpush1.msra.mxu0 0.0
      %325 = vmatprep.subr.mxu0 0.0
      %326 = vmatpush1.msra.mxu0 0.0
      %327 = vmatprep.subr.mxu0 0.0
      %328 = vmatpush1.msra.mxu0 0.0
      %329 = vmatprep.subr.mxu0 0.0
      %330 = vmatpush1.msra.mxu0 0.0
      %331 = vmatprep.subr.mxu0 0.0
      %332 = vmatpush1.msra.mxu0 0.0
      %333 = vmatprep.subr.mxu0 0.0
      %334 = vmatpush1.msra.mxu0 0.0
      %335 = vmatprep.subr.mxu0 0.0
      %336 = vmatpush1.msra.mxu0 0.0
      %337 = vmatprep.subr.mxu0 0.0
      %338 = vmatpush1.msra.mxu0 0.0
      %339 = vmatprep.subr.mxu0 0.0
      %340 = vmatpush1.msra.mxu0 0.0
      %341 = vmatprep.subr.mxu0 0.0
      %342 = vmatpush1.msra.mxu0 0.0
      %343 = vmatprep.subr.mxu0 0.0
      %344 = vmatpush1.msra.mxu0 0.0
      %345 = vmatprep.subr.mxu0 0.0
      %346 = vmatpush1.msra.mxu0 0.0
      %347 = vmatprep.subr.mxu0 0.0
      %348 = vmatpush1.msra.mxu0 0.0
      %349 = vmatprep.subr.mxu0 0.0
      %350 = vmatpush1.msra.mxu0 0.0
      %351 = vmatprep.subr.mxu0 0.0
      %352 = vmatpush1.msra.mxu0 0.0
      %353 = vmatprep.subr.mxu0 0.0
      %354 = vmatpush1.msra.mxu0 0.0
      %355 = vmatprep.subr.mxu0 0.0
      %356 = vmatpush1.msra.mxu0 0.0
      %357 = vmatprep.subr.mxu0 0.0
      %358 = vmatpush1.msra.mxu0 0.0
      %359 = vmatprep.subr.mxu0 0.0
      %360 = vmatpush1.msra.mxu0 0.0
      %361 = vmatprep.subr.mxu0 0.0
      %362 = vmatpush1.msra.mxu0 0.0
      %363 = vmatprep.subr.mxu0 0.0
      %364 = vmatpush1.msra.mxu0 0.0
      %365 = vmatprep.subr.mxu0 0.0
      %366 = vmatpush1.msra.mxu0 0.0
      %367 = vmatprep.subr.mxu0 0.0
      %368 = vmatpush1.msra.mxu0 0.0
      %369 = vmatprep.subr.mxu0 0.0
      %370 = vmatpush1.msra.mxu0 0.0
      %371 = vmatprep.subr.mxu0 0.0
      %372 = vmatpush1.msra.mxu0 0.0
      %373 = vmatprep.mubr.f32.mxu0 0.0
      %374 = vmatmul.mubr.f32.gmra.mrb[0].mxu0 %v275
      %v375 = vpop.f32.mrb[0].mxu0
      %v376 = vadd.f32 %v167, %v375
      %v377 = vpop.f32.mrb[0].mxu0
      %v378 = vadd.f32 %v171, %v377
      %379 = vdwg.mxu0
      %380 = vmatprep.subr.mxu0 %v283
      %381 = vmatpush1.msra.mxu0 %v281
      %382 = vmatprep.subr.mxu0 0.0
      %383 = vmatpush1.msra.mxu0 0.0
      %384 = vmatprep.subr.mxu0 0.0
      %385 = vmatpush1.msra.mxu0 0.0
      %386 = vmatprep.subr.mxu0 0.0
      %387 = vmatpush1.msra.mxu0 0.0
      %388 = vmatprep.subr.mxu0 0.0
      %389 = vmatpush1.msra.mxu0 0.0
      %390 = vmatprep.subr.mxu0 0.0
      %391 = vmatpush1.msra.mxu0 0.0
      %392 = vmatprep.subr.mxu0 0.0
      %393 = vmatpush1.msra.mxu0 0.0
      %394 = vmatprep.subr.mxu0 0.0
      %395 = vmatpush1.msra.mxu0 0.0
      %396 = vmatprep.subr.mxu0 0.0
      %397 = vmatpush1.msra.mxu0 0.0
      %398 = vmatprep.subr.mxu0 0.0
      %399 = vmatpush1.msra.mxu0 0.0
      %400 = vmatprep.subr.mxu0 0.0
      %401 = vmatpush1.msra.mxu0 0.0
      %402 = vmatprep.subr.mxu0 0.0
      %403 = vmatpush1.msra.mxu0 0.0
      %404 = vmatprep.subr.mxu0 0.0
      %405 = vmatpush1.msra.mxu0 0.0
      %406 = vmatprep.subr.mxu0 0.0
      %407 = vmatpush1.msra.mxu0 0.0
      %408 = vmatprep.subr.mxu0 0.0
      %409 = vmatpush1.msra.mxu0 0.0
      %410 = vmatprep.subr.mxu0 0.0
      %411 = vmatpush1.msra.mxu0 0.0
      %412 = vmatprep.subr.mxu0 0.0
      %413 = vmatpush1.msra.mxu0 0.0
      %414 = vmatprep.subr.mxu0 0.0
      %415 = vmatpush1.msra.mxu0 0.0
      %416 = vmatprep.subr.mxu0 0.0
      %417 = vmatpush1.msra.mxu0 0.0
      %418 = vmatprep.subr.mxu0 0.0
      %419 = vmatpush1.msra.mxu0 0.0
      %420 = vmatprep.subr.mxu0 0.0
      %421 = vmatpush1.msra.mxu0 0.0
      %422 = vmatprep.subr.mxu0 0.0
      %423 = vmatpush1.msra.mxu0 0.0
      %424 = vmatprep.subr.mxu0 0.0
      %425 = vmatpush1.msra.mxu0 0.0
      %426 = vmatprep.subr.mxu0 0.0
      %427 = vmatpush1.msra.mxu0 0.0
      %428 = vmatprep.subr.mxu0 0.0
      %429 = vmatpush1.msra.mxu0 0.0
      %430 = vmatprep.subr.mxu0 0.0
      %431 = vmatpush1.msra.mxu0 0.0
      %432 = vmatprep.subr.mxu0 0.0
      %433 = vmatpush1.msra.mxu0 0.0
      %434 = vmatprep.subr.mxu0 0.0
      %435 = vmatpush1.msra.mxu0 0.0
      %436 = vmatprep.subr.mxu0 0.0
      %437 = vmatpush1.msra.mxu0 0.0
      %438 = vmatprep.subr.mxu0 0.0
      %439 = vmatpush1.msra.mxu0 0.0
      %440 = vmatprep.subr.mxu0 0.0
      %441 = vmatpush1.msra.mxu0 0.0
      %442 = vmatprep.subr.mxu0 0.0
      %443 = vmatpush1.msra.mxu0 0.0
      %444 = vmatprep.mubr.f32.mxu0 0.0
      %445 = vmatmul.mubr.f32.gmra.mrb[0].mxu0 %v275
      %v446 = vpop.f32.mrb[0].mxu0
      %v447 = vadd.f32 %v175, %v446
      %v448 = vpop.f32.mrb[0].mxu0
      %v449 = vadd.f32 %v179, %v448
      %450 = vdwg.mxu0
      %451 = vmatprep.subr.mxu0 %v287
      %452 = vmatpush1.msra.mxu0 %v285
      %453 = vmatprep.subr.mxu0 0.0
      %454 = vmatpush1.msra.mxu0 0.0
      %455 = vmatprep.subr.mxu0 0.0
      %456 = vmatpush1.msra.mxu0 0.0
      %457 = vmatprep.subr.mxu0 0.0
      %458 = vmatpush1.msra.mxu0 0.0
      %459 = vmatprep.subr.mxu0 0.0
      %460 = vmatpush1.msra.mxu0 0.0
      %461 = vmatprep.subr.mxu0 0.0
      %462 = vmatpush1.msra.mxu0 0.0
      %463 = vmatprep.subr.mxu0 0.0
      %464 = vmatpush1.msra.mxu0 0.0
      %465 = vmatprep.subr.mxu0 0.0
      %466 = vmatpush1.msra.mxu0 0.0
      %467 = vmatprep.subr.mxu0 0.0
      %468 = vmatpush1.msra.mxu0 0.0
      %469 = vmatprep.subr.mxu0 0.0
      %470 = vmatpush1.msra.mxu0 0.0
      %471 = vmatprep.subr.mxu0 0.0
      %472 = vmatpush1.msra.mxu0 0.0
      %473 = vmatprep.subr.mxu0 0.0
      %474 = vmatpush1.msra.mxu0 0.0
      %475 = vmatprep.subr.mxu0 0.0
      %476 = vmatpush1.msra.mxu0 0.0
      %477 = vmatprep.subr.mxu0 0.0
      %478 = vmatpush1.msra.mxu0 0.0
      %479 = vmatprep.subr.mxu0 0.0
      %480 = vmatpush1.msra.mxu0 0.0
      %481 = vmatprep.subr.mxu0 0.0
      %482 = vmatpush1.msra.mxu0 0.0
      %483 = vmatprep.subr.mxu0 0.0
      %484 = vmatpush1.msra.mxu0 0.0
      %485 = vmatprep.subr.mxu0 0.0
      %486 = vmatpush1.msra.mxu0 0.0
      %487 = vmatprep.subr.mxu0 0.0
      %488 = vmatpush1.msra.mxu0 0.0
      %489 = vmatprep.subr.mxu0 0.0
      %490 = vmatpush1.msra.mxu0 0.0
      %491 = vmatprep.subr.mxu0 0.0
      %492 = vmatpush1.msra.mxu0 0.0
      %493 = vmatprep.subr.mxu0 0.0
      %494 = vmatpush1.msra.mxu0 0.0
      %495 = vmatprep.subr.mxu0 0.0
      %496 = vmatpush1.msra.mxu0 0.0
      %497 = vmatprep.subr.mxu0 0.0
      %498 = vmatpush1.msra.mxu0 0.0
      %499 = vmatprep.subr.mxu0 0.0
      %500 = vmatpush1.msra.mxu0 0.0
      %501 = vmatprep.subr.mxu0 0.0
      %502 = vmatpush1.msra.mxu0 0.0
      %503 = vmatprep.subr.mxu0 0.0
      %504 = vmatpush1.msra.mxu0 0.0
      %505 = vmatprep.subr.mxu0 0.0
      %506 = vmatpush1.msra.mxu0 0.0
      %507 = vmatprep.subr.mxu0 0.0
      %508 = vmatpush1.msra.mxu0 0.0
      %509 = vmatprep.subr.mxu0 0.0
      %510 = vmatpush1.msra.mxu0 0.0
      %511 = vmatprep.subr.mxu0 0.0
      %512 = vmatpush1.msra.mxu0 0.0
      %513 = vmatprep.subr.mxu0 0.0
      %514 = vmatpush1.msra.mxu0 0.0
      %515 = vmatprep.mubr.f32.mxu0 0.0
      %516 = vmatmul.mubr.f32.gmra.mrb[0].mxu0 %v275
      %v517 = vpop.f32.mrb[0].mxu0
      %v518 = vadd.f32 %v183, %v517
      %v519 = vpop.f32.mrb[0].mxu0
      %v520 = vadd.f32 %v187, %v519
      %521 = vdwg.mxu0
      %522 = vmatprep.subr.mxu0 %v291
      %523 = vmatpush1.msra.mxu0 %v289
      %524 = vmatprep.subr.mxu0 0.0
      %525 = vmatpush1.msra.mxu0 0.0
      %526 = vmatprep.subr.mxu0 0.0
      %527 = vmatpush1.msra.mxu0 0.0
      %528 = vmatprep.subr.mxu0 0.0
      %529 = vmatpush1.msra.mxu0 0.0
      %530 = vmatprep.subr.mxu0 0.0
      %531 = vmatpush1.msra.mxu0 0.0
      %532 = vmatprep.subr.mxu0 0.0
      %533 = vmatpush1.msra.mxu0 0.0
      %534 = vmatprep.subr.mxu0 0.0
      %535 = vmatpush1.msra.mxu0 0.0
      %536 = vmatprep.subr.mxu0 0.0
      %537 = vmatpush1.msra.mxu0 0.0
      %538 = vmatprep.subr.mxu0 0.0
      %539 = vmatpush1.msra.mxu0 0.0
      %540 = vmatprep.subr.mxu0 0.0
      %541 = vmatpush1.msra.mxu0 0.0
      %542 = vmatprep.subr.mxu0 0.0
      %543 = vmatpush1.msra.mxu0 0.0
      %544 = vmatprep.subr.mxu0 0.0
      %545 = vmatpush1.msra.mxu0 0.0
      %546 = vmatprep.subr.mxu0 0.0
      %547 = vmatpush1.msra.mxu0 0.0
      %548 = vmatprep.subr.mxu0 0.0
      %549 = vmatpush1.msra.mxu0 0.0
      %550 = vmatprep.subr.mxu0 0.0
      %551 = vmatpush1.msra.mxu0 0.0
      %552 = vmatprep.subr.mxu0 0.0
      %553 = vmatpush1.msra.mxu0 0.0
      %554 = vmatprep.subr.mxu0 0.0
      %555 = vmatpush1.msra.mxu0 0.0
      %556 = vmatprep.subr.mxu0 0.0
      %557 = vmatpush1.msra.mxu0 0.0
      %558 = vmatprep.subr.mxu0 0.0
      %559 = vmatpush1.msra.mxu0 0.0
      %560 = vmatprep.subr.mxu0 0.0
      %561 = vmatpush1.msra.mxu0 0.0
      %562 = vmatprep.subr.mxu0 0.0
      %563 = vmatpush1.msra.mxu0 0.0
      %564 = vmatprep.subr.mxu0 0.0
      %565 = vmatpush1.msra.mxu0 0.0
      %566 = vmatprep.subr.mxu0 0.0
      %567 = vmatpush1.msra.mxu0 0.0
      %568 = vmatprep.subr.mxu0 0.0
      %569 = vmatpush1.msra.mxu0 0.0
      %570 = vmatprep.subr.mxu0 0.0
      %571 = vmatpush1.msra.mxu0 0.0
      %572 = vmatprep.subr.mxu0 0.0
      %573 = vmatpush1.msra.mxu0 0.0
      %574 = vmatprep.subr.mxu0 0.0
      %575 = vmatpush1.msra.mxu0 0.0
      %576 = vmatprep.subr.mxu0 0.0
      %577 = vmatpush1.msra.mxu0 0.0
      %578 = vmatprep.subr.mxu0 0.0
      %579 = vmatpush1.msra.mxu0 0.0
      %580 = vmatprep.subr.mxu0 0.0
      %581 = vmatpush1.msra.mxu0 0.0
      %582 = vmatprep.subr.mxu0 0.0
      %583 = vmatpush1.msra.mxu0 0.0
      %584 = vmatprep.subr.mxu0 0.0
      %585 = vmatpush1.msra.mxu0 0.0
      %586 = vmatprep.mubr.f32.mxu0 0.0
      %587 = vmatmul.mubr.f32.gmra.mrb[0].mxu0 %v275
      %v588 = vpop.f32.mrb[0].mxu0
      %v589 = vadd.f32 %v191, %v588
      %v590 = vpop.f32.mrb[0].mxu0
      %v591 = vadd.f32 %v195, %v590
      %592 = vdwg.mxu0
      %593 = vmatprep.subr.mxu0 %v295
      %594 = vmatpush1.msra.mxu0 %v293
      %595 = vmatprep.subr.mxu0 0.0
      %596 = vmatpush1.msra.mxu0 0.0
      %597 = vmatprep.subr.mxu0 0.0
      %598 = vmatpush1.msra.mxu0 0.0
      %599 = vmatprep.subr.mxu0 0.0
      %600 = vmatpush1.msra.mxu0 0.0
      %601 = vmatprep.subr.mxu0 0.0
      %602 = vmatpush1.msra.mxu0 0.0
      %603 = vmatprep.subr.mxu0 0.0
      %604 = vmatpush1.msra.mxu0 0.0
      %605 = vmatprep.subr.mxu0 0.0
      %606 = vmatpush1.msra.mxu0 0.0
      %607 = vmatprep.subr.mxu0 0.0
      %608 = vmatpush1.msra.mxu0 0.0
      %609 = vmatprep.subr.mxu0 0.0
      %610 = vmatpush1.msra.mxu0 0.0
      %611 = vmatprep.subr.mxu0 0.0
      %612 = vmatpush1.msra.mxu0 0.0
      %613 = vmatprep.subr.mxu0 0.0
      %614 = vmatpush1.msra.mxu0 0.0
      %615 = vmatprep.subr.mxu0 0.0
      %616 = vmatpush1.msra.mxu0 0.0
      %617 = vmatprep.subr.mxu0 0.0
      %618 = vmatpush1.msra.mxu0 0.0
      %619 = vmatprep.subr.mxu0 0.0
      %620 = vmatpush1.msra.mxu0 0.0
      %621 = vmatprep.subr.mxu0 0.0
      %622 = vmatpush1.msra.mxu0 0.0
      %623 = vmatprep.subr.mxu0 0.0
      %624 = vmatpush1.msra.mxu0 0.0
      %625 = vmatprep.subr.mxu0 0.0
      %626 = vmatpush1.msra.mxu0 0.0
      %627 = vmatprep.subr.mxu0 0.0
      %628 = vmatpush1.msra.mxu0 0.0
      %629 = vmatprep.subr.mxu0 0.0
      %630 = vmatpush1.msra.mxu0 0.0
      %631 = vmatprep.subr.mxu0 0.0
      %632 = vmatpush1.msra.mxu0 0.0
      %633 = vmatprep.subr.mxu0 0.0
      %634 = vmatpush1.msra.mxu0 0.0
      %635 = vmatprep.subr.mxu0 0.0
      %636 = vmatpush1.msra.mxu0 0.0
      %637 = vmatprep.subr.mxu0 0.0
      %638 = vmatpush1.msra.mxu0 0.0
      %639 = vmatprep.subr.mxu0 0.0
      %640 = vmatpush1.msra.mxu0 0.0
      %641 = vmatprep.subr.mxu0 0.0
      %642 = vmatpush1.msra.mxu0 0.0
      %643 = vmatprep.subr.mxu0 0.0
      %644 = vmatpush1.msra.mxu0 0.0
      %645 = vmatprep.subr.mxu0 0.0
      %646 = vmatpush1.msra.mxu0 0.0
      %647 = vmatprep.subr.mxu0 0.0
      %648 = vmatpush1.msra.mxu0 0.0
      %649 = vmatprep.subr.mxu0 0.0
      %650 = vmatpush1.msra.mxu0 0.0
      %651 = vmatprep.subr.mxu0 0.0
      %652 = vmatpush1.msra.mxu0 0.0
      %653 = vmatprep.subr.mxu0 0.0
      %654 = vmatpush1.msra.mxu0 0.0
      %655 = vmatprep.subr.mxu0 0.0
      %656 = vmatpush1.msra.mxu0 0.0
      %657 = vmatprep.mubr.f32.mxu0 0.0
      %658 = vmatmul.mubr.f32.gmra.mrb[0].mxu0 %v275
      %v659 = vpop.f32.mrb[0].mxu0
      %v660 = vadd.f32 %v199, %v659
      %v661 = vpop.f32.mrb[0].mxu0
      %v662 = vadd.f32 %v203, %v661
      %663 = vdwg.mxu0
      %664 = vmatprep.subr.mxu0 %v299
      %665 = vmatpush1.msra.mxu0 %v297
      %666 = vmatprep.subr.mxu0 0.0
      %667 = vmatpush1.msra.mxu0 0.0
      %668 = vmatprep.subr.mxu0 0.0
      %669 = vmatpush1.msra.mxu0 0.0
      %670 = vmatprep.subr.mxu0 0.0
      %671 = vmatpush1.msra.mxu0 0.0
      %672 = vmatprep.subr.mxu0 0.0
      %673 = vmatpush1.msra.mxu0 0.0
      %674 = vmatprep.subr.mxu0 0.0
      %675 = vmatpush1.msra.mxu0 0.0
      %676 = vmatprep.subr.mxu0 0.0
      %677 = vmatpush1.msra.mxu0 0.0
      %678 = vmatprep.subr.mxu0 0.0
      %679 = vmatpush1.msra.mxu0 0.0
      %680 = vmatprep.subr.mxu0 0.0
      %681 = vmatpush1.msra.mxu0 0.0
      %682 = vmatprep.subr.mxu0 0.0
      %683 = vmatpush1.msra.mxu0 0.0
      %684 = vmatprep.subr.mxu0 0.0
      %685 = vmatpush1.msra.mxu0 0.0
      %686 = vmatprep.subr.mxu0 0.0
      %687 = vmatpush1.msra.mxu0 0.0
      %688 = vmatprep.subr.mxu0 0.0
      %689 = vmatpush1.msra.mxu0 0.0
      %690 = vmatprep.subr.mxu0 0.0
      %691 = vmatpush1.msra.mxu0 0.0
      %692 = vmatprep.subr.mxu0 0.0
      %693 = vmatpush1.msra.mxu0 0.0
      %694 = vmatprep.subr.mxu0 0.0
      %695 = vmatpush1.msra.mxu0 0.0
      %696 = vmatprep.subr.mxu0 0.0
      %697 = vmatpush1.msra.mxu0 0.0
      %698 = vmatprep.subr.mxu0 0.0
      %699 = vmatpush1.msra.mxu0 0.0
      %700 = vmatprep.subr.mxu0 0.0
      %701 = vmatpush1.msra.mxu0 0.0
      %702 = vmatprep.subr.mxu0 0.0
      %703 = vmatpush1.msra.mxu0 0.0
      %704 = vmatprep.subr.mxu0 0.0
      %705 = vmatpush1.msra.mxu0 0.0
      %706 = vmatprep.subr.mxu0 0.0
      %707 = vmatpush1.msra.mxu0 0.0
      %708 = vmatprep.subr.mxu0 0.0
      %709 = vmatpush1.msra.mxu0 0.0
      %710 = vmatprep.subr.mxu0 0.0
      %711 = vmatpush1.msra.mxu0 0.0
      %712 = vmatprep.subr.mxu0 0.0
      %713 = vmatpush1.msra.mxu0 0.0
      %714 = vmatprep.subr.mxu0 0.0
      %715 = vmatpush1.msra.mxu0 0.0
      %716 = vmatprep.subr.mxu0 0.0
      %717 = vmatpush1.msra.mxu0 0.0
      %718 = vmatprep.subr.mxu0 0.0
      %719 = vmatpush1.msra.mxu0 0.0
      %720 = vmatprep.subr.mxu0 0.0
      %721 = vmatpush1.msra.mxu0 0.0
      %722 = vmatprep.subr.mxu0 0.0
      %723 = vmatpush1.msra.mxu0 0.0
      %724 = vmatprep.subr.mxu0 0.0
      %725 = vmatpush1.msra.mxu0 0.0
      %726 = vmatprep.subr.mxu0 0.0
      %727 = vmatpush1.msra.mxu0 0.0
      %728 = vmatprep.mubr.f32.mxu0 0.0
      %729 = vmatmul.mubr.f32.gmra.mrb[0].mxu0 %v275
      %v730 = vpop.f32.mrb[0].mxu0
      %v731 = vadd.f32 %v207, %v730
      %v732 = vpop.f32.mrb[0].mxu0
      %v733 = vadd.f32 %v211, %v732
      %734 = vdwg.mxu0
      %735 = vmatprep.subr.mxu0 %v303
      %736 = vmatpush1.msra.mxu0 %v301
      %737 = vmatprep.subr.mxu0 0.0
      %738 = vmatpush1.msra.mxu0 0.0
      %739 = vmatprep.subr.mxu0 0.0
      %740 = vmatpush1.msra.mxu0 0.0
      %741 = vmatprep.subr.mxu0 0.0
      %742 = vmatpush1.msra.mxu0 0.0
      %743 = vmatprep.subr.mxu0 0.0
      %744 = vmatpush1.msra.mxu0 0.0
      %745 = vmatprep.subr.mxu0 0.0
      %746 = vmatpush1.msra.mxu0 0.0
      %747 = vmatprep.subr.mxu0 0.0
      %748 = vmatpush1.msra.mxu0 0.0
      %749 = vmatprep.subr.mxu0 0.0
      %750 = vmatpush1.msra.mxu0 0.0
      %751 = vmatprep.subr.mxu0 0.0
      %752 = vmatpush1.msra.mxu0 0.0
      %753 = vmatprep.subr.mxu0 0.0
      %754 = vmatpush1.msra.mxu0 0.0
      %755 = vmatprep.subr.mxu0 0.0
      %756 = vmatpush1.msra.mxu0 0.0
      %757 = vmatprep.subr.mxu0 0.0
      %758 = vmatpush1.msra.mxu0 0.0
      %759 = vmatprep.subr.mxu0 0.0
      %760 = vmatpush1.msra.mxu0 0.0
      %761 = vmatprep.subr.mxu0 0.0
      %762 = vmatpush1.msra.mxu0 0.0
      %763 = vmatprep.subr.mxu0 0.0
      %764 = vmatpush1.msra.mxu0 0.0
      %765 = vmatprep.subr.mxu0 0.0
      %766 = vmatpush1.msra.mxu0 0.0
      %767 = vmatprep.subr.mxu0 0.0
      %768 = vmatpush1.msra.mxu0 0.0
      %769 = vmatprep.subr.mxu0 0.0
      %770 = vmatpush1.msra.mxu0 0.0
      %771 = vmatprep.subr.mxu0 0.0
      %772 = vmatpush1.msra.mxu0 0.0
      %773 = vmatprep.subr.mxu0 0.0
      %774 = vmatpush1.msra.mxu0 0.0
      %775 = vmatprep.subr.mxu0 0.0
      %776 = vmatpush1.msra.mxu0 0.0
      %777 = vmatprep.subr.mxu0 0.0
      %778 = vmatpush1.msra.mxu0 0.0
      %779 = vmatprep.subr.mxu0 0.0
      %780 = vmatpush1.msra.mxu0 0.0
      %781 = vmatprep.subr.mxu0 0.0
      %782 = vmatpush1.msra.mxu0 0.0
      %783 = vmatprep.subr.mxu0 0.0
      %784 = vmatpush1.msra.mxu0 0.0
      %785 = vmatprep.subr.mxu0 0.0
      %786 = vmatpush1.msra.mxu0 0.0
      %787 = vmatprep.subr.mxu0 0.0
      %788 = vmatpush1.msra.mxu0 0.0
      %789 = vmatprep.subr.mxu0 0.0
      %790 = vmatpush1.msra.mxu0 0.0
      %791 = vmatprep.subr.mxu0 0.0
      %792 = vmatpush1.msra.mxu0 0.0
      %793 = vmatprep.subr.mxu0 0.0
      %794 = vmatpush1.msra.mxu0 0.0
      %795 = vmatprep.subr.mxu0 0.0
      %796 = vmatpush1.msra.mxu0 0.0
      %797 = vmatprep.subr.mxu0 0.0
      %798 = vmatpush1.msra.mxu0 0.0
      %799 = vmatprep.mubr.f32.mxu0 0.0
      %800 = vmatmul.mubr.f32.gmra.mrb[0].mxu0 %v275
      %v801 = vpop.f32.mrb[0].mxu0
      %v802 = vadd.f32 %v215, %v801
      %v803 = vpop.f32.mrb[0].mxu0
      %v804 = vadd.f32 %v219, %v803
      %805 = vdwg.mxu0
      %806 = vmatprep.subr.mxu0 %v307
      %807 = vmatpush1.msra.mxu0 %v305
      %808 = vmatprep.subr.mxu0 0.0
      %809 = vmatpush1.msra.mxu0 0.0
      %810 = vmatprep.subr.mxu0 0.0
      %811 = vmatpush1.msra.mxu0 0.0
      %812 = vmatprep.subr.mxu0 0.0
      %813 = vmatpush1.msra.mxu0 0.0
      %814 = vmatprep.subr.mxu0 0.0
      %815 = vmatpush1.msra.mxu0 0.0
      %816 = vmatprep.subr.mxu0 0.0
      %817 = vmatpush1.msra.mxu0 0.0
      %818 = vmatprep.subr.mxu0 0.0
      %819 = vmatpush1.msra.mxu0 0.0
      %820 = vmatprep.subr.mxu0 0.0
      %821 = vmatpush1.msra.mxu0 0.0
      %822 = vmatprep.subr.mxu0 0.0
      %823 = vmatpush1.msra.mxu0 0.0
      %824 = vmatprep.subr.mxu0 0.0
      %825 = vmatpush1.msra.mxu0 0.0
      %826 = vmatprep.subr.mxu0 0.0
      %827 = vmatpush1.msra.mxu0 0.0
      %828 = vmatprep.subr.mxu0 0.0
      %829 = vmatpush1.msra.mxu0 0.0
      %830 = vmatprep.subr.mxu0 0.0
      %831 = vmatpush1.msra.mxu0 0.0
      %832 = vmatprep.subr.mxu0 0.0
      %833 = vmatpush1.msra.mxu0 0.0
      %834 = vmatprep.subr.mxu0 0.0
      %835 = vmatpush1.msra.mxu0 0.0
      %836 = vmatprep.subr.mxu0 0.0
      %837 = vmatpush1.msra.mxu0 0.0
      %838 = vmatprep.subr.mxu0 0.0
      %839 = vmatpush1.msra.mxu0 0.0
      %840 = vmatprep.subr.mxu0 0.0
      %841 = vmatpush1.msra.mxu0 0.0
      %842 = vmatprep.subr.mxu0 0.0
      %843 = vmatpush1.msra.mxu0 0.0
      %844 = vmatprep.subr.mxu0 0.0
      %845 = vmatpush1.msra.mxu0 0.0
      %846 = vmatprep.subr.mxu0 0.0
      %847 = vmatpush1.msra.mxu0 0.0
      %848 = vmatprep.subr.mxu0 0.0
      %849 = vmatpush1.msra.mxu0 0.0
      %850 = vmatprep.subr.mxu0 0.0
      %851 = vmatpush1.msra.mxu0 0.0
      %852 = vmatprep.subr.mxu0 0.0
      %853 = vmatpush1.msra.mxu0 0.0
      %854 = vmatprep.subr.mxu0 0.0
      %855 = vmatpush1.msra.mxu0 0.0
      %856 = vmatprep.subr.mxu0 0.0
      %857 = vmatpush1.msra.mxu0 0.0
      %858 = vmatprep.subr.mxu0 0.0
      %859 = vmatpush1.msra.mxu0 0.0
      %860 = vmatprep.subr.mxu0 0.0
      %861 = vmatpush1.msra.mxu0 0.0
      %862 = vmatprep.subr.mxu0 0.0
      %863 = vmatpush1.msra.mxu0 0.0
      %864 = vmatprep.subr.mxu0 0.0
      %865 = vmatpush1.msra.mxu0 0.0
      %866 = vmatprep.subr.mxu0 0.0
      %867 = vmatpush1.msra.mxu0 0.0
      %868 = vmatprep.subr.mxu0 0.0
      %869 = vmatpush1.msra.mxu0 0.0
      %870 = vmatprep.mubr.f32.mxu0 0.0
      %871 = vmatmul.mubr.f32.gmra.mrb[0].mxu0 %v275
      %v872 = vpop.f32.mrb[0].mxu0
      %v873 = vadd.f32 %v223, %v872
      %v874 = vpop.f32.mrb[0].mxu0
      %v875 = vadd.f32 %v227, %v874
      %876 = vdwg.mxu0
      %v877 = vmax.f32 %v376, 0.0
      %v878 = vmax.f32 %v378, 0.0
      %v879 = vmax.f32 %v447, 0.0
      %v880 = vmax.f32 %v449, 0.0
      %v881 = vmax.f32 %v518, 0.0
      %v882 = vmax.f32 %v520, 0.0
      %v883 = vmax.f32 %v589, 0.0
      %v884 = vmax.f32 %v591, 0.0
      %v885 = vmax.f32 %v660, 0.0
      %v886 = vmax.f32 %v662, 0.0
      %v887 = vmax.f32 %v731, 0.0
      %v888 = vmax.f32 %v733, 0.0
      %v889 = vmax.f32 %v802, 0.0
      %v890 = vmax.f32 %v804, 0.0
      %v891 = vmax.f32 %v873, 0.0
      %v892 = vmax.f32 %v875, 0.0
      %v893 = vpack.c.bf16 %v877, %v877
      %v894 = vpack.c.bf16 %v878, %v878
      %v895 = vpack.c.bf16 %v879, %v879
      %v896 = vpack.c.bf16 %v880, %v880
      %v897 = vpack.c.bf16 %v881, %v881
      %v898 = vpack.c.bf16 %v882, %v882
      %v899 = vpack.c.bf16 %v883, %v883
      %v900 = vpack.c.bf16 %v884, %v884
      %v901 = vpack.c.bf16 %v885, %v885
      %v902 = vpack.c.bf16 %v886, %v886
      %v903 = vpack.c.bf16 %v887, %v887
      %v904 = vpack.c.bf16 %v888, %v888
      %v905 = vpack.c.bf16 %v889, %v889
      %v906 = vpack.c.bf16 %v890, %v890
      %v907 = vpack.c.bf16 %v891, %v891
      %v908 = vpack.c.bf16 %v892, %v892
      %v909 = vld [vmem:[#allocation10] sm:$0xff]
      %v910 = vld [vmem:[#allocation10 + $0x8] sm:$0xff]
      %v911 = vld [vmem:[#allocation10 + $0x10] sm:$0xff]
      %v912 = vld [vmem:[#allocation10 + $0x18] sm:$0xff]
      %v913 = vld [vmem:[#allocation10 + $0x20] sm:$0xff]
      %v914 = vld [vmem:[#allocation10 + $0x28] sm:$0xff]
      %v915 = vld [vmem:[#allocation10 + $0x30] sm:$0xff]
      %v916 = vld [vmem:[#allocation10 + $0x38] sm:$0xff]
      %v917 = vld [vmem:[#allocation10 + $0x40] sm:$0xff]
      %v918 = vld [vmem:[#allocation10 + $0x48] sm:$0xff]
      %v919 = vld [vmem:[#allocation10 + $0x50] sm:$0xff]
      %v920 = vld [vmem:[#allocation10 + $0x58] sm:$0xff]
      %v921 = vld [vmem:[#allocation10 + $0x60] sm:$0xff]
      %v922 = vld [vmem:[#allocation10 + $0x68] sm:$0xff]
      %v923 = vld [vmem:[#allocation10 + $0x70] sm:$0xff]
      %v924 = vld [vmem:[#allocation10 + $0x78] sm:$0xff]
      %v925 = vld [vmem:[#allocation10 + $0x80] sm:$0xff]
      %v926 = vld [vmem:[#allocation10 + $0x88] sm:$0xff]
      %v927 = vld [vmem:[#allocation10 + $0x90] sm:$0xff]
      %v928 = vld [vmem:[#allocation10 + $0x98] sm:$0xff]
      %v929 = vld [vmem:[#allocation10 + $0xa0] sm:$0xff]
      %v930 = vld [vmem:[#allocation10 + $0xa8] sm:$0xff]
      %v931 = vld [vmem:[#allocation10 + $0xb0] sm:$0xff]
      %v932 = vld [vmem:[#allocation10 + $0xb8] sm:$0xff]
      %v933 = vld [vmem:[#allocation10 + $0xc0] sm:$0xff]
      %v934 = vld [vmem:[#allocation10 + $0xc8] sm:$0xff]
      %v935 = vld [vmem:[#allocation10 + $0xd0] sm:$0xff]
      %v936 = vld [vmem:[#allocation10 + $0xd8] sm:$0xff]
      %v937 = vld [vmem:[#allocation10 + $0xe0] sm:$0xff]
      %v938 = vld [vmem:[#allocation10 + $0xe8] sm:$0xff]
      %v939 = vld [vmem:[#allocation10 + $0xf0] sm:$0xff]
      %v940 = vld [vmem:[#allocation10 + $0xf8] sm:$0xff]
      %v941 = vld [vmem:[#allocation10 + $0x100] sm:$0xff]
      %v942 = vld [vmem:[#allocation10 + $0x108] sm:$0xff]
      %v943 = vld [vmem:[#allocation10 + $0x110] sm:$0xff]
      %v944 = vld [vmem:[#allocation10 + $0x118] sm:$0xff]
      %v945 = vld [vmem:[#allocation10 + $0x120] sm:$0xff]
      %v946 = vld [vmem:[#allocation10 + $0x128] sm:$0xff]
      %v947 = vld [vmem:[#allocation10 + $0x130] sm:$0xff]
      %v948 = vld [vmem:[#allocation10 + $0x138] sm:$0xff]
      %v949 = vld [vmem:[#allocation10 + $0x140] sm:$0xff]
      %v950 = vld [vmem:[#allocation10 + $0x148] sm:$0xff]
      %v951 = vld [vmem:[#allocation10 + $0x150] sm:$0xff]
      %v952 = vld [vmem:[#allocation10 + $0x158] sm:$0xff]
      %v953 = vld [vmem:[#allocation10 + $0x160] sm:$0xff]
      %v954 = vld [vmem:[#allocation10 + $0x168] sm:$0xff]
      %v955 = vld [vmem:[#allocation10 + $0x170] sm:$0xff]
      %v956 = vld [vmem:[#allocation10 + $0x178] sm:$0xff]
      %v957 = vld [vmem:[#allocation10 + $0x180] sm:$0xff]
      %v958 = vld [vmem:[#allocation10 + $0x188] sm:$0xff]
      %v959 = vld [vmem:[#allocation10 + $0x190] sm:$0xff]
      %v960 = vld [vmem:[#allocation10 + $0x198] sm:$0xff]
      %v961 = vld [vmem:[#allocation10 + $0x1a0] sm:$0xff]
      %v962 = vld [vmem:[#allocation10 + $0x1a8] sm:$0xff]
      %v963 = vld [vmem:[#allocation10 + $0x1b0] sm:$0xff]
      %v964 = vld [vmem:[#allocation10 + $0x1b8] sm:$0xff]
      %v965 = vld [vmem:[#allocation10 + $0x1c0] sm:$0xff]
      %v966 = vld [vmem:[#allocation10 + $0x1c8] sm:$0xff]
      %v967 = vld [vmem:[#allocation10 + $0x1d0] sm:$0xff]
      %v968 = vld [vmem:[#allocation10 + $0x1d8] sm:$0xff]
      %v969 = vld [vmem:[#allocation10 + $0x1e0] sm:$0xff]
      %v970 = vld [vmem:[#allocation10 + $0x1e8] sm:$0xff]
      %v971 = vld [vmem:[#allocation10 + $0x1f0] sm:$0xff]
      %v972 = vld [vmem:[#allocation10 + $0x1f8] sm:$0xff]
      %v973 = vld [vmem:[#allocation10 + $0x200] sm:$0xff]
      %v974 = vld [vmem:[#allocation10 + $0x208] sm:$0xff]
      %v975 = vld [vmem:[#allocation10 + $0x210] sm:$0xff]
      %v976 = vld [vmem:[#allocation10 + $0x218] sm:$0xff]
      %v977 = vld [vmem:[#allocation10 + $0x220] sm:$0xff]
      %v978 = vld [vmem:[#allocation10 + $0x228] sm:$0xff]
      %v979 = vld [vmem:[#allocation10 + $0x230] sm:$0xff]
      %v980 = vld [vmem:[#allocation10 + $0x238] sm:$0xff]
      %v981 = vld [vmem:[#allocation10 + $0x240] sm:$0xff]
      %v982 = vld [vmem:[#allocation10 + $0x248] sm:$0xff]
      %v983 = vld [vmem:[#allocation10 + $0x250] sm:$0xff]
      %v984 = vld [vmem:[#allocation10 + $0x258] sm:$0xff]
      %v985 = vld [vmem:[#allocation10 + $0x260] sm:$0xff]
      %v986 = vld [vmem:[#allocation10 + $0x268] sm:$0xff]
      %v987 = vld [vmem:[#allocation10 + $0x270] sm:$0xff]
      %v988 = vld [vmem:[#allocation10 + $0x278] sm:$0xff]
      %v989 = vld [vmem:[#allocation10 + $0x280] sm:$0xff]
      %v990 = vld [vmem:[#allocation10 + $0x288] sm:$0xff]
      %v991 = vld [vmem:[#allocation10 + $0x290] sm:$0xff]
      %v992 = vld [vmem:[#allocation10 + $0x298] sm:$0xff]
      %v993 = vld [vmem:[#allocation10 + $0x2a0] sm:$0xff]
      %v994 = vld [vmem:[#allocation10 + $0x2a8] sm:$0xff]
      %v995 = vld [vmem:[#allocation10 + $0x2b0] sm:$0xff]
      %v996 = vld [vmem:[#allocation10 + $0x2b8] sm:$0xff]
      %v997 = vld [vmem:[#allocation10 + $0x2c0] sm:$0xff]
      %v998 = vld [vmem:[#allocation10 + $0x2c8] sm:$0xff]
      %v999 = vld [vmem:[#allocation10 + $0x2d0] sm:$0xff]
      %v1000 = vld [vmem:[#allocation10 + $0x2d8] sm:$0xff]
      %v1001 = vld [vmem:[#allocation10 + $0x2e0] sm:$0xff]
      %v1002 = vld [vmem:[#allocation10 + $0x2e8] sm:$0xff]
      %v1003 = vld [vmem:[#allocation10 + $0x2f0] sm:$0xff]
      %v1004 = vld [vmem:[#allocation10 + $0x2f8] sm:$0xff]
      %v1005 = vld [vmem:[#allocation10 + $0x300] sm:$0xff]
      %v1006 = vld [vmem:[#allocation10 + $0x308] sm:$0xff]
      %v1007 = vld [vmem:[#allocation10 + $0x310] sm:$0xff]
      %v1008 = vld [vmem:[#allocation10 + $0x318] sm:$0xff]
      %v1009 = vld [vmem:[#allocation10 + $0x320] sm:$0xff]
      %v1010 = vld [vmem:[#allocation10 + $0x328] sm:$0xff]
      %v1011 = vld [vmem:[#allocation10 + $0x330] sm:$0xff]
      %v1012 = vld [vmem:[#allocation10 + $0x338] sm:$0xff]
      %v1013 = vld [vmem:[#allocation10 + $0x340] sm:$0xff]
      %v1014 = vld [vmem:[#allocation10 + $0x348] sm:$0xff]
      %v1015 = vld [vmem:[#allocation10 + $0x350] sm:$0xff]
      %v1016 = vld [vmem:[#allocation10 + $0x358] sm:$0xff]
      %v1017 = vld [vmem:[#allocation10 + $0x360] sm:$0xff]
      %v1018 = vld [vmem:[#allocation10 + $0x368] sm:$0xff]
      %v1019 = vld [vmem:[#allocation10 + $0x370] sm:$0xff]
      %v1020 = vld [vmem:[#allocation10 + $0x378] sm:$0xff]
      %v1021 = vld [vmem:[#allocation10 + $0x380] sm:$0xff]
      %v1022 = vld [vmem:[#allocation10 + $0x388] sm:$0xff]
      %v1023 = vld [vmem:[#allocation10 + $0x390] sm:$0xff]
      %v1024 = vld [vmem:[#allocation10 + $0x398] sm:$0xff]
      %v1025 = vld [vmem:[#allocation10 + $0x3a0] sm:$0xff]
      %v1026 = vld [vmem:[#allocation10 + $0x3a8] sm:$0xff]
      %v1027 = vld [vmem:[#allocation10 + $0x3b0] sm:$0xff]
      %v1028 = vld [vmem:[#allocation10 + $0x3b8] sm:$0xff]
      %v1029 = vld [vmem:[#allocation10 + $0x3c0] sm:$0xff]
      %v1030 = vld [vmem:[#allocation10 + $0x3c8] sm:$0xff]
      %v1031 = vld [vmem:[#allocation10 + $0x3d0] sm:$0xff]
      %v1032 = vld [vmem:[#allocation10 + $0x3d8] sm:$0xff]
      %v1033 = vld [vmem:[#allocation10 + $0x3e0] sm:$0xff]
      %v1034 = vld [vmem:[#allocation10 + $0x3e8] sm:$0xff]
      %v1035 = vld [vmem:[#allocation10 + $0x3f0] sm:$0xff]
      %v1036 = vld [vmem:[#allocation10 + $0x3f8] sm:$0xff]
      %v1037 = vunpack.c.l.s8.bf16 %v909
      %v1038 = vunpack.c.l.s8.bf16 %v910
      %v1039 = vunpack.c.h.s8.bf16 %v909
      %v1040 = vunpack.c.h.s8.bf16 %v910
      %v1041 = vunpack.c.l.s8.bf16 %v911
      %v1042 = vunpack.c.l.s8.bf16 %v912
      %v1043 = vunpack.c.h.s8.bf16 %v911
      %v1044 = vunpack.c.h.s8.bf16 %v912
      %v1045 = vunpack.c.l.s8.bf16 %v913
      %v1046 = vunpack.c.l.s8.bf16 %v914
      %v1047 = vunpack.c.h.s8.bf16 %v913
      %v1048 = vunpack.c.h.s8.bf16 %v914
      %v1049 = vunpack.c.l.s8.bf16 %v915
      %v1050 = vunpack.c.l.s8.bf16 %v916
      %v1051 = vunpack.c.h.s8.bf16 %v915
      %v1052 = vunpack.c.h.s8.bf16 %v916
      %v1053 = vunpack.c.l.s8.bf16 %v917
      %v1054 = vunpack.c.l.s8.bf16 %v918
      %v1055 = vunpack.c.h.s8.bf16 %v917
      %v1056 = vunpack.c.h.s8.bf16 %v918
      %v1057 = vunpack.c.l.s8.bf16 %v919
      %v1058 = vunpack.c.l.s8.bf16 %v920
      %v1059 = vunpack.c.h.s8.bf16 %v919
      %v1060 = vunpack.c.h.s8.bf16 %v920
      %v1061 = vunpack.c.l.s8.bf16 %v921
      %v1062 = vunpack.c.l.s8.bf16 %v922
      %v1063 = vunpack.c.h.s8.bf16 %v921
      %v1064 = vunpack.c.h.s8.bf16 %v922
      %v1065 = vunpack.c.l.s8.bf16 %v923
      %v1066 = vunpack.c.l.s8.bf16 %v924
      %v1067 = vunpack.c.h.s8.bf16 %v923
      %v1068 = vunpack.c.h.s8.bf16 %v924
      %v1069 = vunpack.c.l.s8.bf16 %v925
      %v1070 = vunpack.c.l.s8.bf16 %v926
      %v1071 = vunpack.c.h.s8.bf16 %v925
      %v1072 = vunpack.c.h.s8.bf16 %v926
      %v1073 = vunpack.c.l.s8.bf16 %v927
      %v1074 = vunpack.c.l.s8.bf16 %v928
      %v1075 = vunpack.c.h.s8.bf16 %v927
      %v1076 = vunpack.c.h.s8.bf16 %v928
      %v1077 = vunpack.c.l.s8.bf16 %v929
      %v1078 = vunpack.c.l.s8.bf16 %v930
      %v1079 = vunpack.c.h.s8.bf16 %v929
      %v1080 = vunpack.c.h.s8.bf16 %v930
      %v1081 = vunpack.c.l.s8.bf16 %v931
      %v1082 = vunpack.c.l.s8.bf16 %v932
      %v1083 = vunpack.c.h.s8.bf16 %v931
      %v1084 = vunpack.c.h.s8.bf16 %v932
      %v1085 = vunpack.c.l.s8.bf16 %v933
      %v1086 = vunpack.c.l.s8.bf16 %v934
      %v1087 = vunpack.c.h.s8.bf16 %v933
      %v1088 = vunpack.c.h.s8.bf16 %v934
      %v1089 = vunpack.c.l.s8.bf16 %v935
      %v1090 = vunpack.c.l.s8.bf16 %v936
      %v1091 = vunpack.c.h.s8.bf16 %v935
      %v1092 = vunpack.c.h.s8.bf16 %v936
      %v1093 = vunpack.c.l.s8.bf16 %v937
      %v1094 = vunpack.c.l.s8.bf16 %v938
      %v1095 = vunpack.c.h.s8.bf16 %v937
      %v1096 = vunpack.c.h.s8.bf16 %v938
      %v1097 = vunpack.c.l.s8.bf16 %v939
      %v1098 = vunpack.c.l.s8.bf16 %v940
      %v1099 = vunpack.c.h.s8.bf16 %v939
      %v1100 = vunpack.c.h.s8.bf16 %v940
      %v1101 = vunpack.c.l.s8.bf16 %v941
      %v1102 = vunpack.c.l.s8.bf16 %v942
      %v1103 = vunpack.c.h.s8.bf16 %v941
      %v1104 = vunpack.c.h.s8.bf16 %v942
      %v1105 = vunpack.c.l.s8.bf16 %v943
      %v1106 = vunpack.c.l.s8.bf16 %v944
      %v1107 = vunpack.c.h.s8.bf16 %v943
      %v1108 = vunpack.c.h.s8.bf16 %v944
      %v1109 = vunpack.c.l.s8.bf16 %v945
      %v1110 = vunpack.c.l.s8.bf16 %v946
      %v1111 = vunpack.c.h.s8.bf16 %v945
      %v1112 = vunpack.c.h.s8.bf16 %v946
      %v1113 = vunpack.c.l.s8.bf16 %v947
      %v1114 = vunpack.c.l.s8.bf16 %v948
      %v1115 = vunpack.c.h.s8.bf16 %v947
      %v1116 = vunpack.c.h.s8.bf16 %v948
      %v1117 = vunpack.c.l.s8.bf16 %v949
      %v1118 = vunpack.c.l.s8.bf16 %v950
      %v1119 = vunpack.c.h.s8.bf16 %v949
      %v1120 = vunpack.c.h.s8.bf16 %v950
      %v1121 = vunpack.c.l.s8.bf16 %v951
      %v1122 = vunpack.c.l.s8.bf16 %v952
      %v1123 = vunpack.c.h.s8.bf16 %v951
      %v1124 = vunpack.c.h.s8.bf16 %v952
      %v1125 = vunpack.c.l.s8.bf16 %v953
      %v1126 = vunpack.c.l.s8.bf16 %v954
      %v1127 = vunpack.c.h.s8.bf16 %v953
      %v1128 = vunpack.c.h.s8.bf16 %v954
      %v1129 = vunpack.c.l.s8.bf16 %v955
      %v1130 = vunpack.c.l.s8.bf16 %v956
      %v1131 = vunpack.c.h.s8.bf16 %v955
      %v1132 = vunpack.c.h.s8.bf16 %v956
      %v1133 = vunpack.c.l.s8.bf16 %v957
      %v1134 = vunpack.c.l.s8.bf16 %v958
      %v1135 = vunpack.c.h.s8.bf16 %v957
      %v1136 = vunpack.c.h.s8.bf16 %v958
      %v1137 = vunpack.c.l.s8.bf16 %v959
      %v1138 = vunpack.c.l.s8.bf16 %v960
      %v1139 = vunpack.c.h.s8.bf16 %v959
      %v1140 = vunpack.c.h.s8.bf16 %v960
      %v1141 = vunpack.c.l.s8.bf16 %v961
      %v1142 = vunpack.c.l.s8.bf16 %v962
      %v1143 = vunpack.c.h.s8.bf16 %v961
      %v1144 = vunpack.c.h.s8.bf16 %v962
      %v1145 = vunpack.c.l.s8.bf16 %v963
      %v1146 = vunpack.c.l.s8.bf16 %v964
      %v1147 = vunpack.c.h.s8.bf16 %v963
      %v1148 = vunpack.c.h.s8.bf16 %v964
      %v1149 = vunpack.c.l.s8.bf16 %v965
      %v1150 = vunpack.c.l.s8.bf16 %v966
      %v1151 = vunpack.c.h.s8.bf16 %v965
      %v1152 = vunpack.c.h.s8.bf16 %v966
      %v1153 = vunpack.c.l.s8.bf16 %v967
      %v1154 = vunpack.c.l.s8.bf16 %v968
      %v1155 = vunpack.c.h.s8.bf16 %v967
      %v1156 = vunpack.c.h.s8.bf16 %v968
      %v1157 = vunpack.c.l.s8.bf16 %v969
      %v1158 = vunpack.c.l.s8.bf16 %v970
      %v1159 = vunpack.c.h.s8.bf16 %v969
      %v1160 = vunpack.c.h.s8.bf16 %v970
      %v1161 = vunpack.c.l.s8.bf16 %v971
      %v1162 = vunpack.c.l.s8.bf16 %v972
      %v1163 = vunpack.c.h.s8.bf16 %v971
      %v1164 = vunpack.c.h.s8.bf16 %v972
      %v1165 = vunpack.c.l.s8.bf16 %v973
      %v1166 = vunpack.c.l.s8.bf16 %v974
      %v1167 = vunpack.c.h.s8.bf16 %v973
      %v1168 = vunpack.c.h.s8.bf16 %v974
      %v1169 = vunpack.c.l.s8.bf16 %v975
      %v1170 = vunpack.c.l.s8.bf16 %v976
      %v1171 = vunpack.c.h.s8.bf16 %v975
      %v1172 = vunpack.c.h.s8.bf16 %v976
      %v1173 = vunpack.c.l.s8.bf16 %v977
      %v1174 = vunpack.c.l.s8.bf16 %v978
      %v1175 = vunpack.c.h.s8.bf16 %v977
      %v1176 = vunpack.c.h.s8.bf16 %v978
      %v1177 = vunpack.c.l.s8.bf16 %v979
      %v1178 = vunpack.c.l.s8.bf16 %v980
      %v1179 = vunpack.c.h.s8.bf16 %v979
      %v1180 = vunpack.c.h.s8.bf16 %v980
      %v1181 = vunpack.c.l.s8.bf16 %v981
      %v1182 = vunpack.c.l.s8.bf16 %v982
      %v1183 = vunpack.c.h.s8.bf16 %v981
      %v1184 = vunpack.c.h.s8.bf16 %v982
      %v1185 = vunpack.c.l.s8.bf16 %v983
      %v1186 = vunpack.c.l.s8.bf16 %v984
      %v1187 = vunpack.c.h.s8.bf16 %v983
      %v1188 = vunpack.c.h.s8.bf16 %v984
      %v1189 = vunpack.c.l.s8.bf16 %v985
      %v1190 = vunpack.c.l.s8.bf16 %v986
      %v1191 = vunpack.c.h.s8.bf16 %v985
      %v1192 = vunpack.c.h.s8.bf16 %v986
      %v1193 = vunpack.c.l.s8.bf16 %v987
      %v1194 = vunpack.c.l.s8.bf16 %v988
      %v1195 = vunpack.c.h.s8.bf16 %v987
      %v1196 = vunpack.c.h.s8.bf16 %v988
      %v1197 = vunpack.c.l.s8.bf16 %v989
      %v1198 = vunpack.c.l.s8.bf16 %v990
      %v1199 = vunpack.c.h.s8.bf16 %v989
      %v1200 = vunpack.c.h.s8.bf16 %v990
      %v1201 = vunpack.c.l.s8.bf16 %v991
      %v1202 = vunpack.c.l.s8.bf16 %v992
      %v1203 = vunpack.c.h.s8.bf16 %v991
      %v1204 = vunpack.c.h.s8.bf16 %v992
      %v1205 = vunpack.c.l.s8.bf16 %v993
      %v1206 = vunpack.c.l.s8.bf16 %v994
      %v1207 = vunpack.c.h.s8.bf16 %v993
      %v1208 = vunpack.c.h.s8.bf16 %v994
      %v1209 = vunpack.c.l.s8.bf16 %v995
      %v1210 = vunpack.c.l.s8.bf16 %v996
      %v1211 = vunpack.c.h.s8.bf16 %v995
      %v1212 = vunpack.c.h.s8.bf16 %v996
      %v1213 = vunpack.c.l.s8.bf16 %v997
      %v1214 = vunpack.c.l.s8.bf16 %v998
      %v1215 = vunpack.c.h.s8.bf16 %v997
      %v1216 = vunpack.c.h.s8.bf16 %v998
      %v1217 = vunpack.c.l.s8.bf16 %v999
      %v1218 = vunpack.c.l.s8.bf16 %v1000
      %v1219 = vunpack.c.h.s8.bf16 %v999
      %v1220 = vunpack.c.h.s8.bf16 %v1000
      %v1221 = vunpack.c.l.s8.bf16 %v1001
      %v1222 = vunpack.c.l.s8.bf16 %v1002
      %v1223 = vunpack.c.h.s8.bf16 %v1001
      %v1224 = vunpack.c.h.s8.bf16 %v1002
      %v1225 = vunpack.c.l.s8.bf16 %v1003
      %v1226 = vunpack.c.l.s8.bf16 %v1004
      %v1227 = vunpack.c.h.s8.bf16 %v1003
      %v1228 = vunpack.c.h.s8.bf16 %v1004
      %v1229 = vunpack.c.l.s8.bf16 %v1005
      %v1230 = vunpack.c.l.s8.bf16 %v1006
      %v1231 = vunpack.c.h.s8.bf16 %v1005
      %v1232 = vunpack.c.h.s8.bf16 %v1006
      %v1233 = vunpack.c.l.s8.bf16 %v1007
      %v1234 = vunpack.c.l.s8.bf16 %v1008
      %v1235 = vunpack.c.h.s8.bf16 %v1007
      %v1236 = vunpack.c.h.s8.bf16 %v1008
      %v1237 = vunpack.c.l.s8.bf16 %v1009
      %v1238 = vunpack.c.l.s8.bf16 %v1010
      %v1239 = vunpack.c.h.s8.bf16 %v1009
      %v1240 = vunpack.c.h.s8.bf16 %v1010
      %v1241 = vunpack.c.l.s8.bf16 %v1011
      %v1242 = vunpack.c.l.s8.bf16 %v1012
      %v1243 = vunpack.c.h.s8.bf16 %v1011
      %v1244 = vunpack.c.h.s8.bf16 %v1012
      %v1245 = vunpack.c.l.s8.bf16 %v1013
      %v1246 = vunpack.c.l.s8.bf16 %v1014
      %v1247 = vunpack.c.h.s8.bf16 %v1013
      %v1248 = vunpack.c.h.s8.bf16 %v1014
      %v1249 = vunpack.c.l.s8.bf16 %v1015
      %v1250 = vunpack.c.l.s8.bf16 %v1016
      %v1251 = vunpack.c.h.s8.bf16 %v1015
      %v1252 = vunpack.c.h.s8.bf16 %v1016
      %v1253 = vunpack.c.l.s8.bf16 %v1017
      %v1254 = vunpack.c.l.s8.bf16 %v1018
      %v1255 = vunpack.c.h.s8.bf16 %v1017
      %v1256 = vunpack.c.h.s8.bf16 %v1018
      %v1257 = vunpack.c.l.s8.bf16 %v1019
      %v1258 = vunpack.c.l.s8.bf16 %v1020
      %v1259 = vunpack.c.h.s8.bf16 %v1019
      %v1260 = vunpack.c.h.s8.bf16 %v1020
      %v1261 = vunpack.c.l.s8.bf16 %v1021
      %v1262 = vunpack.c.l.s8.bf16 %v1022
      %v1263 = vunpack.c.h.s8.bf16 %v1021
      %v1264 = vunpack.c.h.s8.bf16 %v1022
      %v1265 = vunpack.c.l.s8.bf16 %v1023
      %v1266 = vunpack.c.l.s8.bf16 %v1024
      %v1267 = vunpack.c.h.s8.bf16 %v1023
      %v1268 = vunpack.c.h.s8.bf16 %v1024
      %v1269 = vunpack.c.l.s8.bf16 %v1025
      %v1270 = vunpack.c.l.s8.bf16 %v1026
      %v1271 = vunpack.c.h.s8.bf16 %v1025
      %v1272 = vunpack.c.h.s8.bf16 %v1026
      %v1273 = vunpack.c.l.s8.bf16 %v1027
      %v1274 = vunpack.c.l.s8.bf16 %v1028
      %v1275 = vunpack.c.h.s8.bf16 %v1027
      %v1276 = vunpack.c.h.s8.bf16 %v1028
      %v1277 = vunpack.c.l.s8.bf16 %v1029
      %v1278 = vunpack.c.l.s8.bf16 %v1030
      %v1279 = vunpack.c.h.s8.bf16 %v1029
      %v1280 = vunpack.c.h.s8.bf16 %v1030
      %v1281 = vunpack.c.l.s8.bf16 %v1031
      %v1282 = vunpack.c.l.s8.bf16 %v1032
      %v1283 = vunpack.c.h.s8.bf16 %v1031
      %v1284 = vunpack.c.h.s8.bf16 %v1032
      %v1285 = vunpack.c.l.s8.bf16 %v1033
      %v1286 = vunpack.c.l.s8.bf16 %v1034
      %v1287 = vunpack.c.h.s8.bf16 %v1033
      %v1288 = vunpack.c.h.s8.bf16 %v1034
      %v1289 = vunpack.c.l.s8.bf16 %v1035
      %v1290 = vunpack.c.l.s8.bf16 %v1036
      %v1291 = vunpack.c.h.s8.bf16 %v1035
      %v1292 = vunpack.c.h.s8.bf16 %v1036
      %1293 = vmatprep.subr.bf16.mxu0 %v1038
      %1294 = vmatpush1.bf16.msra.mxu0 %v1037
      %1295 = vmatprep.subr.bf16.mxu0 %v1040
      %1296 = vmatpush1.bf16.msra.mxu0 %v1039
      %1297 = vmatprep.subr.bf16.mxu0 %v1042
      %1298 = vmatpush1.bf16.msra.mxu0 %v1041
      %1299 = vmatprep.subr.bf16.mxu0 %v1044
      %1300 = vmatpush1.bf16.msra.mxu0 %v1043
      %1301 = vmatprep.subr.bf16.mxu0 %v1046
      %1302 = vmatpush1.bf16.msra.mxu0 %v1045
      %1303 = vmatprep.subr.bf16.mxu0 %v1048
      %1304 = vmatpush1.bf16.msra.mxu0 %v1047
      %1305 = vmatprep.subr.bf16.mxu0 %v1050
      %1306 = vmatpush1.bf16.msra.mxu0 %v1049
      %1307 = vmatprep.subr.bf16.mxu0 %v1052
      %1308 = vmatpush1.bf16.msra.mxu0 %v1051
      %1309 = vmatprep.subr.bf16.mxu0 %v1054
      %1310 = vmatpush1.bf16.msra.mxu0 %v1053
      %1311 = vmatprep.subr.bf16.mxu0 %v1056
      %1312 = vmatpush1.bf16.msra.mxu0 %v1055
      %1313 = vmatprep.subr.bf16.mxu0 %v1058
      %1314 = vmatpush1.bf16.msra.mxu0 %v1057
      %1315 = vmatprep.subr.bf16.mxu0 %v1060
      %1316 = vmatpush1.bf16.msra.mxu0 %v1059
      %1317 = vmatprep.subr.bf16.mxu0 %v1062
      %1318 = vmatpush1.bf16.msra.mxu0 %v1061
      %1319 = vmatprep.subr.bf16.mxu0 %v1064
      %1320 = vmatpush1.bf16.msra.mxu0 %v1063
      %1321 = vmatprep.subr.bf16.mxu0 %v1066
      %1322 = vmatpush1.bf16.msra.mxu0 %v1065
      %1323 = vmatprep.subr.bf16.mxu0 %v1068
      %1324 = vmatpush1.bf16.msra.mxu0 %v1067
      %1325 = vmatprep.mubr.bf16.mxu0 %v894
      %1326 = vmatmul.mubr.bf16.gmra.mrb[0].mxu0 %v893
      %v1327 = vpop.f32.mrb[0].mxu0
      %v1328 = vadd.f32 0.0, %v1327
      %v1329 = vpop.f32.mrb[0].mxu0
      %v1330 = vadd.f32 0.0, %v1329
      %v1331 = vpop.f32.mrb[0].mxu0
      %v1332 = vpop.f32.mrb[0].mxu0
      %1333 = vdwg.mxu0
      %1334 = vmatprep.subr.bf16.mxu0 %v1070
      %1335 = vmatpush1.bf16.msra.mxu0 %v1069
      %1336 = vmatprep.subr.bf16.mxu0 %v1072
      %1337 = vmatpush1.bf16.msra.mxu0 %v1071
      %1338 = vmatprep.subr.bf16.mxu0 %v1074
      %1339 = vmatpush1.bf16.msra.mxu0 %v1073
      %1340 = vmatprep.subr.bf16.mxu0 %v1076
      %1341 = vmatpush1.bf16.msra.mxu0 %v1075
      %1342 = vmatprep.subr.bf16.mxu0 %v1078
      %1343 = vmatpush1.bf16.msra.mxu0 %v1077
      %1344 = vmatprep.subr.bf16.mxu0 %v1080
      %1345 = vmatpush1.bf16.msra.mxu0 %v1079
      %1346 = vmatprep.subr.bf16.mxu0 %v1082
      %1347 = vmatpush1.bf16.msra.mxu0 %v1081
      %1348 = vmatprep.subr.bf16.mxu0 %v1084
      %1349 = vmatpush1.bf16.msra.mxu0 %v1083
      %1350 = vmatprep.subr.bf16.mxu0 %v1086
      %1351 = vmatpush1.bf16.msra.mxu0 %v1085
      %1352 = vmatprep.subr.bf16.mxu0 %v1088
      %1353 = vmatpush1.bf16.msra.mxu0 %v1087
      %1354 = vmatprep.subr.bf16.mxu0 %v1090
      %1355 = vmatpush1.bf16.msra.mxu0 %v1089
      %1356 = vmatprep.subr.bf16.mxu0 %v1092
      %1357 = vmatpush1.bf16.msra.mxu0 %v1091
      %1358 = vmatprep.subr.bf16.mxu0 %v1094
      %1359 = vmatpush1.bf16.msra.mxu0 %v1093
      %1360 = vmatprep.subr.bf16.mxu0 %v1096
      %1361 = vmatpush1.bf16.msra.mxu0 %v1095
      %1362 = vmatprep.subr.bf16.mxu0 %v1098
      %1363 = vmatpush1.bf16.msra.mxu0 %v1097
      %1364 = vmatprep.subr.bf16.mxu0 %v1100
      %1365 = vmatpush1.bf16.msra.mxu0 %v1099
      %1366 = vmatprep.mubr.bf16.mxu0 %v896
      %1367 = vmatmul.mubr.bf16.gmra.mrb[0].mxu0 %v895
      %v1368 = vpop.f32.mrb[0].mxu0
      %v1369 = vadd.f32 %v1328, %v1368
      %v1370 = vpop.f32.mrb[0].mxu0
      %v1371 = vadd.f32 %v1330, %v1370
      %v1372 = vpop.f32.mrb[0].mxu0
      %v1373 = vpop.f32.mrb[0].mxu0
      %1374 = vdwg.mxu0
      %1375 = vmatprep.subr.bf16.mxu0 %v1102
      %1376 = vmatpush1.bf16.msra.mxu0 %v1101
      %1377 = vmatprep.subr.bf16.mxu0 %v1104
      %1378 = vmatpush1.bf16.msra.mxu0 %v1103
      %1379 = vmatprep.subr.bf16.mxu0 %v1106
      %1380 = vmatpush1.bf16.msra.mxu0 %v1105
      %1381 = vmatprep.subr.bf16.mxu0 %v1108
      %1382 = vmatpush1.bf16.msra.mxu0 %v1107
      %1383 = vmatprep.subr.bf16.mxu0 %v1110
      %1384 = vmatpush1.bf16.msra.mxu0 %v1109
      %1385 = vmatprep.subr.bf16.mxu0 %v1112
      %1386 = vmatpush1.bf16.msra.mxu0 %v1111
      %1387 = vmatprep.subr.bf16.mxu0 %v1114
      %1388 = vmatpush1.bf16.msra.mxu0 %v1113
      %1389 = vmatprep.subr.bf16.mxu0 %v1116
      %1390 = vmatpush1.bf16.msra.mxu0 %v1115
      %1391 = vmatprep.subr.bf16.mxu0 %v1118
      %1392 = vmatpush1.bf16.msra.mxu0 %v1117
      %1393 = vmatprep.subr.bf16.mxu0 %v1120
      %1394 = vmatpush1.bf16.msra.mxu0 %v1119
      %1395 = vmatprep.subr.bf16.mxu0 %v1122
      %1396 = vmatpush1.bf16.msra.mxu0 %v1121
      %1397 = vmatprep.subr.bf16.mxu0 %v1124
      %1398 = vmatpush1.bf16.msra.mxu0 %v1123
      %1399 = vmatprep.subr.bf16.mxu0 %v1126
      %1400 = vmatpush1.bf16.msra.mxu0 %v1125
      %1401 = vmatprep.subr.bf16.mxu0 %v1128
      %1402 = vmatpush1.bf16.msra.mxu0 %v1127
      %1403 = vmatprep.subr.bf16.mxu0 %v1130
      %1404 = vmatpush1.bf16.msra.mxu0 %v1129
      %1405 = vmatprep.subr.bf16.mxu0 %v1132
      %1406 = vmatpush1.bf16.msra.mxu0 %v1131
      %1407 = vmatprep.mubr.bf16.mxu0 %v898
      %1408 = vmatmul.mubr.bf16.gmra.mrb[0].mxu0 %v897
      %v1409 = vpop.f32.mrb[0].mxu0
      %v1410 = vadd.f32 %v1369, %v1409
      %v1411 = vpop.f32.mrb[0].mxu0
      %v1412 = vadd.f32 %v1371, %v1411
      %v1413 = vpop.f32.mrb[0].mxu0
      %v1414 = vpop.f32.mrb[0].mxu0
      %1415 = vdwg.mxu0
      %1416 = vmatprep.subr.bf16.mxu0 %v1134
      %1417 = vmatpush1.bf16.msra.mxu0 %v1133
      %1418 = vmatprep.subr.bf16.mxu0 %v1136
      %1419 = vmatpush1.bf16.msra.mxu0 %v1135
      %1420 = vmatprep.subr.bf16.mxu0 %v1138
      %1421 = vmatpush1.bf16.msra.mxu0 %v1137
      %1422 = vmatprep.subr.bf16.mxu0 %v1140
      %1423 = vmatpush1.bf16.msra.mxu0 %v1139
      %1424 = vmatprep.subr.bf16.mxu0 %v1142
      %1425 = vmatpush1.bf16.msra.mxu0 %v1141
      %1426 = vmatprep.subr.bf16.mxu0 %v1144
      %1427 = vmatpush1.bf16.msra.mxu0 %v1143
      %1428 = vmatprep.subr.bf16.mxu0 %v1146
      %1429 = vmatpush1.bf16.msra.mxu0 %v1145
      %1430 = vmatprep.subr.bf16.mxu0 %v1148
      %1431 = vmatpush1.bf16.msra.mxu0 %v1147
      %1432 = vmatprep.subr.bf16.mxu0 %v1150
      %1433 = vmatpush1.bf16.msra.mxu0 %v1149
      %1434 = vmatprep.subr.bf16.mxu0 %v1152
      %1435 = vmatpush1.bf16.msra.mxu0 %v1151
      %1436 = vmatprep.subr.bf16.mxu0 %v1154
      %1437 = vmatpush1.bf16.msra.mxu0 %v1153
      %1438 = vmatprep.subr.bf16.mxu0 %v1156
      %1439 = vmatpush1.bf16.msra.mxu0 %v1155
      %1440 = vmatprep.subr.bf16.mxu0 %v1158
      %1441 = vmatpush1.bf16.msra.mxu0 %v1157
      %1442 = vmatprep.subr.bf16.mxu0 %v1160
      %1443 = vmatpush1.bf16.msra.mxu0 %v1159
      %1444 = vmatprep.subr.bf16.mxu0 %v1162
      %1445 = vmatpush1.bf16.msra.mxu0 %v1161
      %1446 = vmatprep.subr.bf16.mxu0 %v1164
      %1447 = vmatpush1.bf16.msra.mxu0 %v1163
      %1448 = vmatprep.mubr.bf16.mxu0 %v900
      %1449 = vmatmul.mubr.bf16.gmra.mrb[0].mxu0 %v899
      %v1450 = vpop.f32.mrb[0].mxu0
      %v1451 = vadd.f32 %v1410, %v1450
      %v1452 = vpop.f32.mrb[0].mxu0
      %v1453 = vadd.f32 %v1412, %v1452
      %v1454 = vpop.f32.mrb[0].mxu0
      %v1455 = vpop.f32.mrb[0].mxu0
      %1456 = vdwg.mxu0
      %1457 = vmatprep.subr.bf16.mxu0 %v1166
      %1458 = vmatpush1.bf16.msra.mxu0 %v1165
      %1459 = vmatprep.subr.bf16.mxu0 %v1168
      %1460 = vmatpush1.bf16.msra.mxu0 %v1167
      %1461 = vmatprep.subr.bf16.mxu0 %v1170
      %1462 = vmatpush1.bf16.msra.mxu0 %v1169
      %1463 = vmatprep.subr.bf16.mxu0 %v1172
      %1464 = vmatpush1.bf16.msra.mxu0 %v1171
      %1465 = vmatprep.subr.bf16.mxu0 %v1174
      %1466 = vmatpush1.bf16.msra.mxu0 %v1173
      %1467 = vmatprep.subr.bf16.mxu0 %v1176
      %1468 = vmatpush1.bf16.msra.mxu0 %v1175
      %1469 = vmatprep.subr.bf16.mxu0 %v1178
      %1470 = vmatpush1.bf16.msra.mxu0 %v1177
      %1471 = vmatprep.subr.bf16.mxu0 %v1180
      %1472 = vmatpush1.bf16.msra.mxu0 %v1179
      %1473 = vmatprep.subr.bf16.mxu0 %v1182
      %1474 = vmatpush1.bf16.msra.mxu0 %v1181
      %1475 = vmatprep.subr.bf16.mxu0 %v1184
      %1476 = vmatpush1.bf16.msra.mxu0 %v1183
      %1477 = vmatprep.subr.bf16.mxu0 %v1186
      %1478 = vmatpush1.bf16.msra.mxu0 %v1185
      %1479 = vmatprep.subr.bf16.mxu0 %v1188
      %1480 = vmatpush1.bf16.msra.mxu0 %v1187
      %1481 = vmatprep.subr.bf16.mxu0 %v1190
      %1482 = vmatpush1.bf16.msra.mxu0 %v1189
      %1483 = vmatprep.subr.bf16.mxu0 %v1192
      %1484 = vmatpush1.bf16.msra.mxu0 %v1191
      %1485 = vmatprep.subr.bf16.mxu0 %v1194
      %1486 = vmatpush1.bf16.msra.mxu0 %v1193
      %1487 = vmatprep.subr.bf16.mxu0 %v1196
      %1488 = vmatpush1.bf16.msra.mxu0 %v1195
      %1489 = vmatprep.mubr.bf16.mxu0 %v902
      %1490 = vmatmul.mubr.bf16.gmra.mrb[0].mxu0 %v901
      %v1491 = vpop.f32.mrb[0].mxu0
      %v1492 = vadd.f32 %v1451, %v1491
      %v1493 = vpop.f32.mrb[0].mxu0
      %v1494 = vadd.f32 %v1453, %v1493
      %v1495 = vpop.f32.mrb[0].mxu0
      %v1496 = vpop.f32.mrb[0].mxu0
      %1497 = vdwg.mxu0
      %1498 = vmatprep.subr.bf16.mxu0 %v1198
      %1499 = vmatpush1.bf16.msra.mxu0 %v1197
      %1500 = vmatprep.subr.bf16.mxu0 %v1200
      %1501 = vmatpush1.bf16.msra.mxu0 %v1199
      %1502 = vmatprep.subr.bf16.mxu0 %v1202
      %1503 = vmatpush1.bf16.msra.mxu0 %v1201
      %1504 = vmatprep.subr.bf16.mxu0 %v1204
      %1505 = vmatpush1.bf16.msra.mxu0 %v1203
      %1506 = vmatprep.subr.bf16.mxu0 %v1206
      %1507 = vmatpush1.bf16.msra.mxu0 %v1205
      %1508 = vmatprep.subr.bf16.mxu0 %v1208
      %1509 = vmatpush1.bf16.msra.mxu0 %v1207
      %1510 = vmatprep.subr.bf16.mxu0 %v1210
      %1511 = vmatpush1.bf16.msra.mxu0 %v1209
      %1512 = vmatprep.subr.bf16.mxu0 %v1212
      %1513 = vmatpush1.bf16.msra.mxu0 %v1211
      %1514 = vmatprep.subr.bf16.mxu0 %v1214
      %1515 = vmatpush1.bf16.msra.mxu0 %v1213
      %1516 = vmatprep.subr.bf16.mxu0 %v1216
      %1517 = vmatpush1.bf16.msra.mxu0 %v1215
      %1518 = vmatprep.subr.bf16.mxu0 %v1218
      %1519 = vmatpush1.bf16.msra.mxu0 %v1217
      %1520 = vmatprep.subr.bf16.mxu0 %v1220
      %1521 = vmatpush1.bf16.msra.mxu0 %v1219
      %1522 = vmatprep.subr.bf16.mxu0 %v1222
      %1523 = vmatpush1.bf16.msra.mxu0 %v1221
      %1524 = vmatprep.subr.bf16.mxu0 %v1224
      %1525 = vmatpush1.bf16.msra.mxu0 %v1223
      %1526 = vmatprep.subr.bf16.mxu0 %v1226
      %1527 = vmatpush1.bf16.msra.mxu0 %v1225
      %1528 = vmatprep.subr.bf16.mxu0 %v1228
      %1529 = vmatpush1.bf16.msra.mxu0 %v1227
      %1530 = vmatprep.mubr.bf16.mxu0 %v904
      %1531 = vmatmul.mubr.bf16.gmra.mrb[0].mxu0 %v903
      %v1532 = vpop.f32.mrb[0].mxu0
      %v1533 = vadd.f32 %v1492, %v1532
      %v1534 = vpop.f32.mrb[0].mxu0
      %v1535 = vadd.f32 %v1494, %v1534
      %v1536 = vpop.f32.mrb[0].mxu0
      %v1537 = vpop.f32.mrb[0].mxu0
      %1538 = vdwg.mxu0
      %1539 = vmatprep.subr.bf16.mxu0 %v1230
      %1540 = vmatpush1.bf16.msra.mxu0 %v1229
      %1541 = vmatprep.subr.bf16.mxu0 %v1232
      %1542 = vmatpush1.bf16.msra.mxu0 %v1231
      %1543 = vmatprep.subr.bf16.mxu0 %v1234
      %1544 = vmatpush1.bf16.msra.mxu0 %v1233
      %1545 = vmatprep.subr.bf16.mxu0 %v1236
      %1546 = vmatpush1.bf16.msra.mxu0 %v1235
      %1547 = vmatprep.subr.bf16.mxu0 %v1238
      %1548 = vmatpush1.bf16.msra.mxu0 %v1237
      %1549 = vmatprep.subr.bf16.mxu0 %v1240
      %1550 = vmatpush1.bf16.msra.mxu0 %v1239
      %1551 = vmatprep.subr.bf16.mxu0 %v1242
      %1552 = vmatpush1.bf16.msra.mxu0 %v1241
      %1553 = vmatprep.subr.bf16.mxu0 %v1244
      %1554 = vmatpush1.bf16.msra.mxu0 %v1243
      %1555 = vmatprep.subr.bf16.mxu0 %v1246
      %1556 = vmatpush1.bf16.msra.mxu0 %v1245
      %1557 = vmatprep.subr.bf16.mxu0 %v1248
      %1558 = vmatpush1.bf16.msra.mxu0 %v1247
      %1559 = vmatprep.subr.bf16.mxu0 %v1250
      %1560 = vmatpush1.bf16.msra.mxu0 %v1249
      %1561 = vmatprep.subr.bf16.mxu0 %v1252
      %1562 = vmatpush1.bf16.msra.mxu0 %v1251
      %1563 = vmatprep.subr.bf16.mxu0 %v1254
      %1564 = vmatpush1.bf16.msra.mxu0 %v1253
      %1565 = vmatprep.subr.bf16.mxu0 %v1256
      %1566 = vmatpush1.bf16.msra.mxu0 %v1255
      %1567 = vmatprep.subr.bf16.mxu0 %v1258
      %1568 = vmatpush1.bf16.msra.mxu0 %v1257
      %1569 = vmatprep.subr.bf16.mxu0 %v1260
      %1570 = vmatpush1.bf16.msra.mxu0 %v1259
      %1571 = vmatprep.mubr.bf16.mxu0 %v906
      %1572 = vmatmul.mubr.bf16.gmra.mrb[0].mxu0 %v905
      %v1573 = vpop.f32.mrb[0].mxu0
      %v1574 = vadd.f32 %v1533, %v1573
      %v1575 = vpop.f32.mrb[0].mxu0
      %v1576 = vadd.f32 %v1535, %v1575
      %v1577 = vpop.f32.mrb[0].mxu0
      %v1578 = vpop.f32.mrb[0].mxu0
      %1579 = vdwg.mxu0
      %1580 = vmatprep.subr.bf16.mxu0 %v1262
      %1581 = vmatpush1.bf16.msra.mxu0 %v1261
      %1582 = vmatprep.subr.bf16.mxu0 %v1264
      %1583 = vmatpush1.bf16.msra.mxu0 %v1263
      %1584 = vmatprep.subr.bf16.mxu0 %v1266
      %1585 = vmatpush1.bf16.msra.mxu0 %v1265
      %1586 = vmatprep.subr.bf16.mxu0 %v1268
      %1587 = vmatpush1.bf16.msra.mxu0 %v1267
      %1588 = vmatprep.subr.bf16.mxu0 %v1270
      %1589 = vmatpush1.bf16.msra.mxu0 %v1269
      %1590 = vmatprep.subr.bf16.mxu0 %v1272
      %1591 = vmatpush1.bf16.msra.mxu0 %v1271
      %1592 = vmatprep.subr.bf16.mxu0 %v1274
      %1593 = vmatpush1.bf16.msra.mxu0 %v1273
      %1594 = vmatprep.subr.bf16.mxu0 %v1276
      %1595 = vmatpush1.bf16.msra.mxu0 %v1275
      %1596 = vmatprep.subr.bf16.mxu0 %v1278
      %1597 = vmatpush1.bf16.msra.mxu0 %v1277
      %1598 = vmatprep.subr.bf16.mxu0 %v1280
      %1599 = vmatpush1.bf16.msra.mxu0 %v1279
      %1600 = vmatprep.subr.bf16.mxu0 %v1282
      %1601 = vmatpush1.bf16.msra.mxu0 %v1281
      %1602 = vmatprep.subr.bf16.mxu0 %v1284
      %1603 = vmatpush1.bf16.msra.mxu0 %v1283
      %1604 = vmatprep.subr.bf16.mxu0 %v1286
      %1605 = vmatpush1.bf16.msra.mxu0 %v1285
      %1606 = vmatprep.subr.bf16.mxu0 %v1288
      %1607 = vmatpush1.bf16.msra.mxu0 %v1287
      %1608 = vmatprep.subr.bf16.mxu0 %v1290
      %1609 = vmatpush1.bf16.msra.mxu0 %v1289
      %1610 = vmatprep.subr.bf16.mxu0 %v1292
      %1611 = vmatpush1.bf16.msra.mxu0 %v1291
      %1612 = vmatprep.mubr.bf16.mxu0 %v908
      %1613 = vmatmul.mubr.bf16.gmra.mrb[0].mxu0 %v907
      %v1614 = vpop.f32.mrb[0].mxu0
      %v1615 = vadd.f32 %v1574, %v1614
      %v1616 = vpop.f32.mrb[0].mxu0
      %v1617 = vadd.f32 %v1576, %v1616
      %v1618 = vpop.f32.mrb[0].mxu0
      %v1619 = vpop.f32.mrb[0].mxu0
      %1620 = vdwg.mxu0
      %v1621 = vld [vmem:[%s4] sm:$0x3]
      %v1623 = vlaneseq
      %v1624 = vshrl.u32 %v1623, 7
      %v1625 = vsub.s32 0, %v1624
      %v1626 = vrot.slane %v1621, %v1625
      %v1627 = vlaneseq
      %v1628 = vshrl.u32 %v1627, 7
      %v1629 = vsub.s32 1, %v1628
      %v1630 = vrot.slane %v1621, %v1629
      %v1633 = vmul.f32 %v1615, %v1626
      %v1634 = vmul.f32 %v1617, %v1630
      %v1635 = vld [vmem:[%s5] sm:$0x3]
      %v1637 = vlaneseq
      %v1638 = vshrl.u32 %v1637, 7
      %v1639 = vsub.s32 0, %v1638
      %v1640 = vrot.slane %v1635, %v1639
      %v1641 = vlaneseq
      %v1642 = vshrl.u32 %v1641, 7
      %v1643 = vsub.s32 1, %v1642
      %v1644 = vrot.slane %v1635, %v1643
      %v1647 = vadd.f32 %v1633, %v1640
      %v1648 = vadd.f32 %v1634, %v1644
      %v1649 = vmax.f32 %v1647, 0.0
      %v1650 = vmax.f32 %v1648, 0.0
      %v1651 = vpack.c.bf16 %v1649, %v1649
      %v1652 = vpack.c.bf16 %v1650, %v1650
      %v1653 = vld [vmem:[#allocation12] sm:$0xff]
      %v1654 = vld [vmem:[#allocation12 + $0x8] sm:$0xff]
      %v1655 = vld [vmem:[#allocation12 + $0x10] sm:$0xff]
      %v1656 = vld [vmem:[#allocation12 + $0x18] sm:$0xff]
      %v1657 = vld [vmem:[#allocation12 + $0x20] sm:$0xff]
      %v1658 = vld [vmem:[#allocation12 + $0x28] sm:$0xff]
      %v1659 = vld [vmem:[#allocation12 + $0x30] sm:$0xff]
      %v1660 = vld [vmem:[#allocation12 + $0x38] sm:$0xff]
      %v1661 = vld [vmem:[#allocation12 + $0x40] sm:$0xff]
      %v1662 = vld [vmem:[#allocation12 + $0x48] sm:$0xff]
      %v1663 = vld [vmem:[#allocation12 + $0x50] sm:$0xff]
      %v1664 = vld [vmem:[#allocation12 + $0x58] sm:$0xff]
      %v1665 = vld [vmem:[#allocation12 + $0x60] sm:$0xff]
      %v1666 = vld [vmem:[#allocation12 + $0x68] sm:$0xff]
      %v1667 = vld [vmem:[#allocation12 + $0x70] sm:$0xff]
      %v1668 = vld [vmem:[#allocation12 + $0x78] sm:$0xff]
      %v1669 = vld [vmem:[#allocation12 + $0x80] sm:$0xff]
      %v1670 = vld [vmem:[#allocation12 + $0x88] sm:$0xff]
      %v1671 = vld [vmem:[#allocation12 + $0x90] sm:$0xff]
      %v1672 = vld [vmem:[#allocation12 + $0x98] sm:$0xff]
      %v1673 = vld [vmem:[#allocation12 + $0xa0] sm:$0xff]
      %v1674 = vld [vmem:[#allocation12 + $0xa8] sm:$0xff]
      %v1675 = vld [vmem:[#allocation12 + $0xb0] sm:$0xff]
      %v1676 = vld [vmem:[#allocation12 + $0xb8] sm:$0xff]
      %v1677 = vld [vmem:[#allocation12 + $0xc0] sm:$0xff]
      %v1678 = vld [vmem:[#allocation12 + $0xc8] sm:$0xff]
      %v1679 = vld [vmem:[#allocation12 + $0xd0] sm:$0xff]
      %v1680 = vld [vmem:[#allocation12 + $0xd8] sm:$0xff]
      %v1681 = vld [vmem:[#allocation12 + $0xe0] sm:$0xff]
      %v1682 = vld [vmem:[#allocation12 + $0xe8] sm:$0xff]
      %v1683 = vld [vmem:[#allocation12 + $0xf0] sm:$0xff]
      %v1684 = vld [vmem:[#allocation12 + $0xf8] sm:$0xff]
      %v1685 = vld [vmem:[%s7] sm:$0x3]
      %v1687 = vlaneseq
      %v1688 = vshrl.u32 %v1687, 7
      %v1689 = vsub.s32 0, %v1688
      %v1690 = vrot.slane %v1685, %v1689
      %v1691 = vlaneseq
      %v1692 = vshrl.u32 %v1691, 7
      %v1693 = vsub.s32 1, %v1692
      %v1694 = vrot.slane %v1685, %v1693
      %v1729 = vunpack.c.l.b16 %v1653
      %v1730 = vunpack.c.h.b16 %v1653
      %v1731 = vunpack.c.l.b16 %v1654
      %v1732 = vunpack.c.h.b16 %v1654
      %v1733 = vunpack.c.l.b16 %v1655
      %v1734 = vunpack.c.h.b16 %v1655
      %v1735 = vunpack.c.l.b16 %v1656
      %v1736 = vunpack.c.h.b16 %v1656
      %v1737 = vunpack.c.l.b16 %v1657
      %v1738 = vunpack.c.h.b16 %v1657
      %v1739 = vunpack.c.l.b16 %v1658
      %v1740 = vunpack.c.h.b16 %v1658
      %v1741 = vunpack.c.l.b16 %v1659
      %v1742 = vunpack.c.h.b16 %v1659
      %v1743 = vunpack.c.l.b16 %v1660
      %v1744 = vunpack.c.h.b16 %v1660
      %v1745 = vunpack.c.l.b16 %v1661
      %v1746 = vunpack.c.h.b16 %v1661
      %v1747 = vunpack.c.l.b16 %v1662
      %v1748 = vunpack.c.h.b16 %v1662
      %v1749 = vunpack.c.l.b16 %v1663
      %v1750 = vunpack.c.h.b16 %v1663
      %v1751 = vunpack.c.l.b16 %v1664
      %v1752 = vunpack.c.h.b16 %v1664
      %v1753 = vunpack.c.l.b16 %v1665
      %v1754 = vunpack.c.h.b16 %v1665
      %v1755 = vunpack.c.l.b16 %v1666
      %v1756 = vunpack.c.h.b16 %v1666
      %v1757 = vunpack.c.l.b16 %v1667
      %v1758 = vunpack.c.h.b16 %v1667
      %v1759 = vunpack.c.l.b16 %v1668
      %v1760 = vunpack.c.h.b16 %v1668
      %v1761 = vunpack.c.l.b16 %v1669
      %v1762 = vunpack.c.h.b16 %v1669
      %v1763 = vunpack.c.l.b16 %v1670
      %v1764 = vunpack.c.h.b16 %v1670
      %v1765 = vunpack.c.l.b16 %v1671
      %v1766 = vunpack.c.h.b16 %v1671
      %v1767 = vunpack.c.l.b16 %v1672
      %v1768 = vunpack.c.h.b16 %v1672
      %v1769 = vunpack.c.l.b16 %v1673
      %v1770 = vunpack.c.h.b16 %v1673
      %v1771 = vunpack.c.l.b16 %v1674
      %v1772 = vunpack.c.h.b16 %v1674
      %v1773 = vunpack.c.l.b16 %v1675
      %v1774 = vunpack.c.h.b16 %v1675
      %v1775 = vunpack.c.l.b16 %v1676
      %v1776 = vunpack.c.h.b16 %v1676
      %v1777 = vunpack.c.l.b16 %v1677
      %v1778 = vunpack.c.h.b16 %v1677
      %v1779 = vunpack.c.l.b16 %v1678
      %v1780 = vunpack.c.h.b16 %v1678
      %v1781 = vunpack.c.l.b16 %v1679
      %v1782 = vunpack.c.h.b16 %v1679
      %v1783 = vunpack.c.l.b16 %v1680
      %v1784 = vunpack.c.h.b16 %v1680
      %v1785 = vunpack.c.l.b16 %v1681
      %v1786 = vunpack.c.h.b16 %v1681
      %v1787 = vunpack.c.l.b16 %v1682
      %v1788 = vunpack.c.h.b16 %v1682
      %v1789 = vunpack.c.l.b16 %v1683
      %v1790 = vunpack.c.h.b16 %v1683
      %v1791 = vunpack.c.l.b16 %v1684
      %v1792 = vunpack.c.h.b16 %v1684
      %v1793 = vpack.c.b16 %v1731, %v1729
      %v1794 = vpack.c.b16 %v1732, %v1730
      %v1795 = vpack.c.b16 %v1735, %v1733
      %v1796 = vpack.c.b16 %v1736, %v1734
      %v1797 = vpack.c.b16 %v1739, %v1737
      %v1798 = vpack.c.b16 %v1740, %v1738
      %v1799 = vpack.c.b16 %v1743, %v1741
      %v1800 = vpack.c.b16 %v1744, %v1742
      %v1801 = vpack.c.b16 %v1747, %v1745
      %v1802 = vpack.c.b16 %v1748, %v1746
      %v1803 = vpack.c.b16 %v1751, %v1749
      %v1804 = vpack.c.b16 %v1752, %v1750
      %v1805 = vpack.c.b16 %v1755, %v1753
      %v1806 = vpack.c.b16 %v1756, %v1754
      %v1807 = vpack.c.b16 %v1759, %v1757
      %v1808 = vpack.c.b16 %v1760, %v1758
      %v1809 = vpack.c.b16 %v1763, %v1761
      %v1810 = vpack.c.b16 %v1764, %v1762
      %v1811 = vpack.c.b16 %v1767, %v1765
      %v1812 = vpack.c.b16 %v1768, %v1766
      %v1813 = vpack.c.b16 %v1771, %v1769
      %v1814 = vpack.c.b16 %v1772, %v1770
      %v1815 = vpack.c.b16 %v1775, %v1773
      %v1816 = vpack.c.b16 %v1776, %v1774
      %v1817 = vpack.c.b16 %v1779, %v1777
      %v1818 = vpack.c.b16 %v1780, %v1778
      %v1819 = vpack.c.b16 %v1783, %v1781
      %v1820 = vpack.c.b16 %v1784, %v1782
      %v1821 = vpack.c.b16 %v1787, %v1785
      %v1822 = vpack.c.b16 %v1788, %v1786
      %v1823 = vpack.c.b16 %v1791, %v1789
      %v1824 = vpack.c.b16 %v1792, %v1790
      %1857 = vmatprep.subr.bf16.mxu0 %v1794
      %1858 = vmatpush1.bf16.msra.mxu0 %v1793
      %1859 = vmatprep.subr.bf16.mxu0 %v1796
      %1860 = vmatpush1.bf16.msra.mxu0 %v1795
      %1861 = vmatprep.subr.bf16.mxu0 %v1798
      %1862 = vmatpush1.bf16.msra.mxu0 %v1797
      %1863 = vmatprep.subr.bf16.mxu0 %v1800
      %1864 = vmatpush1.bf16.msra.mxu0 %v1799
      %1865 = vmatprep.subr.bf16.mxu0 %v1802
      %1866 = vmatpush1.bf16.msra.mxu0 %v1801
      %1867 = vmatprep.subr.bf16.mxu0 %v1804
      %1868 = vmatpush1.bf16.msra.mxu0 %v1803
      %1869 = vmatprep.subr.bf16.mxu0 %v1806
      %1870 = vmatpush1.bf16.msra.mxu0 %v1805
      %1871 = vmatprep.subr.bf16.mxu0 %v1808
      %1872 = vmatpush1.bf16.msra.mxu0 %v1807
      %1873 = vmatprep.subr.bf16.mxu0 %v1810
      %1874 = vmatpush1.bf16.msra.mxu0 %v1809
      %1875 = vmatprep.subr.bf16.mxu0 %v1812
      %1876 = vmatpush1.bf16.msra.mxu0 %v1811
      %1877 = vmatprep.subr.bf16.mxu0 %v1814
      %1878 = vmatpush1.bf16.msra.mxu0 %v1813
      %1879 = vmatprep.subr.bf16.mxu0 %v1816
      %1880 = vmatpush1.bf16.msra.mxu0 %v1815
      %1881 = vmatprep.subr.bf16.mxu0 %v1818
      %1882 = vmatpush1.bf16.msra.mxu0 %v1817
      %1883 = vmatprep.subr.bf16.mxu0 %v1820
      %1884 = vmatpush1.bf16.msra.mxu0 %v1819
      %1885 = vmatprep.subr.bf16.mxu0 %v1822
      %1886 = vmatpush1.bf16.msra.mxu0 %v1821
      %1887 = vmatprep.subr.bf16.mxu0 %v1824
      %1888 = vmatpush1.bf16.msra.mxu0 %v1823
      %1889 = vmatprep.mubr.bf16.mxu0 %v1652
      %1890 = vmatmul.mubr.bf16.gmra.mrb[0].mxu0 %v1651
      %v1891 = vpop.f32.mrb[0].mxu0
      %v1892 = vadd.f32 %v1690, %v1891
      %v1893 = vpop.f32.mrb[0].mxu0
      %v1894 = vadd.f32 %v1694, %v1893
      %v1895 = vpop.f32.mrb[0].mxu0
      %v1896 = vpop.f32.mrb[0].mxu0
      %1897 = vdwg.mxu0
      %v1898 = vmax.f32 %v1892, 0.0
      %v1899 = vmax.f32 %v1894, 0.0
      %v1900 = vld [vmem:[%s8] sm:$0x3]
      %v1902 = vlaneseq
      %v1903 = vshrl.u32 %v1902, 7
      %v1904 = vsub.s32 0, %v1903
      %v1905 = vrot.slane %v1900, %v1904
      %v1906 = vlaneseq
      %v1907 = vshrl.u32 %v1906, 7
      %v1908 = vsub.s32 1, %v1907
      %v1909 = vrot.slane %v1900, %v1908
      %v1912 = vmul.f32 %v1898, %v1905
      %v1913 = vmul.f32 %v1899, %v1909
      %vm1914 = vcmask 1041408
      %v1915 = vsel %vm1914, %v1912, 0.0
      %v1916 = vsel %vm1914, %v1913, 0.0
      %v1917 = vadd.f32 %v1915, %v1916
      %1918 = vadd.xlane.f32.xlu0 %v1917
      %v1919 = vpop.xlane.xlu0 %1918
      %s1920 = sld [smem:[#allocation3]]
      %v1921 = vstv %s1920
      %v1922 = vadd.f32 %v1919, %v1921
      %1923 = vst [vmem:[#allocation13] sm:$0x3] %v1922
    $region69: #{tpu_custom_call.1} parent=1 // pred_fallthru
      _
    // Predicated region
    $region70: #{tpu_custom_call.1} parent=1 // pred_check
      _
    $region71: #{tpu_custom_call.1} parent=1 // pred_check_branch
      %1925 = sbr.rel (0) target = $region73
    $region72: #{tpu_custom_call.1} parent=1 // pred_region
      %s1927 = ssub.s32 32, 32
      %1928 = vsyncadd [#allocation6], %s1927
      %s1930 = sshll.u32 [#allocation13], 4
      %s1931 = int_to_ptr.vmem [resolvable:$true] %s1930
      %1933 = dma.vmem_to_hbm [thread:$0]  %s1931, 32, %s10, [#allocation6]
    $region73: #{tpu_custom_call.1} parent=1 // pred_fallthru
      _
    // Predicated region
    $region74: #{tpu_custom_call.1} parent=1 // pred_check
      _
    $region75: #{tpu_custom_call.1} parent=1 // pred_check_branch
      %1935 = sbr.rel (0) target = $region77
    $region76: #{tpu_custom_call.1} parent=1 // pred_region
      %1936 = dma.done [#allocation6], 32
    $region77: #{tpu_custom_call.1} parent=1 // pred_fallthru
      _
    %1937 = vsyncpa [#allocation5], 1
    %1938 = vsyncpa [#allocation8], 1
    %1939 = vsyncpa [#allocation11], 1
    %1940 = vsyncpa [#allocation6], 1

</llo_original>
